<compile_context>
chip_gen: v5e
topology: v5e:2x2
jax: 0.10.0
libtpu: 0.0.40
codegen_flags: <defaults>
</compile_context>

<pallas_src>
import functools
import math

import jax
import jax.numpy as jnp
from jax.experimental import pallas as pl
from jax.experimental.pallas import tpu as pltpu


def _round_up(x, m):
    return (x + m - 1) // m * m


def attn_decoder_kernel(
    gather_from_hbm,   # static (bound via functools.partial)
    *refs,
):
    if gather_from_hbm:
        (ids_ref, emb_ref, enc_ref, h0_ref, c0_ref,
         w_ace_ref, w_h1_ref, w_comb_h_ref, w_x0_ref, w_hh0_ref, w_x1_ref,
         w_out_ref, bias_ref,
         out_ref, h_out_ref, c_out_ref, attn_w_ref,
         emb_vmem, gather_sem) = refs
    else:
        (ids_ref, emb_ref, enc_ref, h0_ref, c0_ref,
         w_ace_ref, w_h1_ref, w_comb_h_ref, w_x0_ref, w_hh0_ref, w_x1_ref,
         w_out_ref, bias_ref,
         out_ref, h_out_ref, c_out_ref, attn_w_ref) = refs

    f32, bf16 = jnp.float32, jnp.bfloat16
    B, H = h0_ref.shape[1], h0_ref.shape[2]
    H4 = 4 * H
    E = w_ace_ref.shape[0]
    A_pad = attn_w_ref.shape[1]
    E_cpad = w_comb_h_ref.shape[1]
    V_pad = out_ref.shape[1]
    V_tbl = emb_ref.shape[0]

    # ---- start the embedding-row gather DMAs first (HBM path) so their latency hides
    #      behind the emb-independent hidden-state matmuls below ----
    copies = []
    if gather_from_hbm:
        for b in range(B):
            idx = jnp.maximum(jnp.minimum(ids_ref[b], V_tbl - 1), 0)
            cp = pltpu.make_async_copy(
                emb_ref.at[pl.ds(idx, 1), :],
                emb_vmem.at[pl.ds(b, 1), :],
                gather_sem.at[b],
            )
            cp.start()
            copies.append(cp)

    # ---- emb-independent dots (hoisted above the gather wait) ----
    h_top_bf = h0_ref[1].astype(bf16)                       # (B, H) last-layer hidden
    h_bot_bf = h0_ref[0].astype(bf16)
    # fused same-LHS dot: [w_attn_h | W_hh1^T]  ->  one MXU push instead of two
    h1_fused = jnp.dot(h_top_bf, w_h1_ref[...],
                       preferred_element_type=f32)          # (B, A_pad + 4H)
    attn_h_part = h1_fused[:, :A_pad]
    gates1_h = h1_fused[:, A_pad:A_pad + H4]
    gates0_h = jnp.dot(h_bot_bf, w_hh0_ref[...],
                       preferred_element_type=f32)          # (B, 4H)

    # ---- embedding rows ----
    if gather_from_hbm:
        for cp in copies:
            cp.wait()
        emb = emb_vmem[...]                                  # (B, E) bf16
    else:
        rows = []
        for b in range(B):
            idx = jnp.maximum(jnp.minimum(ids_ref[b], V_tbl - 1), 0)
            rows.append(emb_ref[pl.ds(idx, 1), :])
        emb = jnp.concatenate(rows, axis=0).astype(bf16)     # (B, E)
    # TODO(synk): nn.Dropout on the embedding treated as identity (inference mode).

    # ---- attention logits (no lane concat): emb @ [w_attn_e | w_comb_e] ----
    ace = jnp.dot(emb, w_ace_ref[...], preferred_element_type=f32)  # (B, A_pad + E_cpad)
    attn_logits = ace[:, :A_pad] + attn_h_part + bias_ref[0:1, :A_pad]
    m = jnp.max(attn_logits, axis=1, keepdims=True)
    p = jnp.exp(attn_logits - m)
    attn_w = p * pl.reciprocal(jnp.sum(p, axis=1, keepdims=True), approx=True)
    attn_w_ref[...] = attn_w                                  # (B, A_pad) lane-dense

    # ---- attn_applied = bmm(attn_w, encoder_outputs) on the MXU ----
    attn_applied = jnp.einsum(
        "bqa,bah->bqh",
        attn_w.astype(bf16).reshape(B, 1, A_pad),
        enc_ref[...],
        preferred_element_type=f32,
    )[:, 0, :]                                                # (B, H) f32

    # ---- attn_combine (lane-dense x; pad lanes are exactly zero) ----
    x = (ace[:, A_pad:A_pad + E_cpad]
         + jnp.dot(attn_applied.astype(bf16), w_comb_h_ref[...],
                   preferred_element_type=f32)
         + bias_ref[1:2, :E_cpad])                            # (B, E_cpad) f32

    # ---- single-step 2-layer LSTM (PyTorch gate order i, f, g, o); f32 elementwise ----
    def gates_to_hc(gates, c_prev):
        i_g = jax.nn.sigmoid(gates[:, 0:H])
        f_g = jax.nn.sigmoid(gates[:, H:2 * H])
        g_g = jnp.tanh(gates[:, 2 * H:3 * H])
        o_g = jax.nn.sigmoid(gates[:, 3 * H:4 * H])
        c_new = f_g * c_prev + i_g * g_g
        h_new = o_g * jnp.tanh(c_new)
        return h_new, c_new

    gates0 = (jnp.dot(x.astype(bf16), w_x0_ref[...], preferred_element_type=f32)
              + gates0_h + bias_ref[2:3, :H4])
    h_new0, c_new0 = gates_to_hc(gates0, c0_ref[0])

    gates1 = (jnp.dot(h_new0.astype(bf16), w_x1_ref[...], preferred_element_type=f32)
              + gates1_h + bias_ref[3:4, :H4])
    h_new1, c_new1 = gates_to_hc(gates1, c0_ref[1])

    # ---- output projection + log_softmax (pad cols carry -1e30 bias -> no effect) ----
    logits = (jnp.dot(h_new1.astype(bf16), w_out_ref[...], preferred_element_type=f32)
              + bias_ref[4:5, :V_pad])                        # (B, V_pad) f32
    lm = jnp.max(logits, axis=1, keepdims=True)
    lse = jnp.log(jnp.sum(jnp.exp(logits - lm), axis=1, keepdims=True)) + lm
    out_ref[...] = logits - lse
    # TODO(synk): at realistic vocab sizes tile the projection over V_pad (grid axis + online
    #             logsumexp) instead of keeping (H, V_pad) fully VMEM-resident.

    # all state writes strictly after all state reads (h0/c0 are aliased in place)
    h_out_ref[0] = h_new0
    h_out_ref[1] = h_new1
    c_out_ref[0] = c_new0
    c_out_ref[1] = c_new1


def prepare_params(params, *, vmem_table_bytes_max=512 * 1024):
    """One-time packing of the module's weights into kernel-ready buffers."""
    f32, bf16 = jnp.float32, jnp.bfloat16
    NEG = jnp.float32(-1e30)

    emb = jnp.asarray(params["embedding"], f32)
    V, E = emb.shape
    H4 = jnp.asarray(params["w_ih0"]).shape[0]
    H = H4 // 4
    A = jnp.asarray(params["w_attn"]).shape[0]

    A_pad = _round_up(A, 128)
    E_cpad = _round_up(E, 128)
    V_pad = _round_up(V, 128)
    BW = _round_up(max(A_pad, E_cpad, H4, V_pad), 128)

    def t(w):                     # PyTorch (out, in) -> (in, out)
        return jnp.asarray(w, f32).T

    w_attn = jnp.asarray(params["w_attn"], f32)               # (A, E+H), cat = (emb, h_top)
    w_comb = jnp.asarray(params["w_comb"], f32)               # (E, E+H), cat = (emb, applied)

    # emb-side of attn and attn_combine fused, both halves vreg-aligned: (E, A_pad + E_cpad)
    w_ace = jnp.zeros((E, A_pad + E_cpad), f32)
    w_ace = w_ace.at[:, :A].set(w_attn[:, :E].T)
    w_ace = w_ace.at[:, A_pad:A_pad + E].set(w_comb[:, :E].T)

    # fused same-LHS (h_top) weights: [w_attn_h | W_hh1^T]  -> (H, A_pad + 4H)
    w_h1 = jnp.zeros((H, A_pad + H4), f32)
    w_h1 = w_h1.at[:, :A].set(w_attn[:, E:].T)
    w_h1 = w_h1.at[:, A_pad:].set(t(params["w_hh1"]))

    w_comb_h = jnp.zeros((H, E_cpad), f32).at[:, :E].set(w_comb[:, E:].T)

    w_x0 = jnp.zeros((E_cpad, H4), f32).at[:E, :].set(t(params["w_ih0"]))   # layer-0 input
    w_hh0 = t(params["w_hh0"])                                              # layer-0 hidden
    w_x1 = t(params["w_ih1"])                                               # layer-1 input

    w_out = jnp.zeros((H, V_pad), f32).at[:, :V].set(t(params["w_out"]))

    # all biases in one (8, BW) f32 buffer; b_ih + b_hh fused; -1e30 on softmax pad columns
    bias = jnp.zeros((8, BW), f32)
    bias = bias.at[0, :A_pad].set(
        jnp.full((A_pad,), NEG, f32).at[:A].set(jnp.asarray(params["b_attn"], f32)))
    bias = bias.at[1, :E].set(jnp.asarray(params["b_comb"], f32))
    bias = bias.at[2, :H4].set(
        jnp.asarray(params["b_ih0"], f32) + jnp.asarray(params["b_hh0"], f32))
    bias = bias.at[3, :H4].set(
        jnp.asarray(params["b_ih1"], f32) + jnp.asarray(params["b_hh1"], f32))
    bias = bias.at[4, :V_pad].set(
        jnp.full((V_pad,), NEG, f32).at[:V].set(jnp.asarray(params["b_out"], f32)))

    # tiny tables live in VMEM (f32, safe dynamic row reads); large tables stay in HBM as
    # bf16 (64 B rows) and are gathered with per-row DMAs.
    gather_from_hbm = (V * E * 2) > vmem_table_bytes_max
    emb_tbl = emb.astype(bf16) if gather_from_hbm else emb

    packed = {
        "emb_tbl": emb_tbl,
        "w_ace": w_ace.astype(bf16),
        "w_h1": w_h1.astype(bf16),
        "w_comb_h": w_comb_h.astype(bf16),
        "w_x0": w_x0.astype(bf16),
        "w_hh0": w_hh0.astype(bf16),
        "w_x1": w_x1.astype(bf16),
        "w_out": w_out.astype(bf16),
        "bias": bias,
    }
    meta = dict(V=V, E=E, H=H, A=A, A_pad=A_pad, E_cpad=E_cpad, V_pad=V_pad, BW=BW,
                gather_from_hbm=gather_from_hbm)
    return packed, meta


def prepare_encoder_outputs(encoder_outputs, meta):
    """Per-sequence (not per-step) padding/cast of encoder outputs."""
    B, A, H = encoder_outputs.shape
    enc = jnp.zeros((B, meta["A_pad"], H), jnp.float32)
    enc = enc.at[:, :A, :].set(jnp.asarray(encoder_outputs, jnp.float32))
    return enc.astype(jnp.bfloat16)


def attn_decoder_step(ids, packed, meta, hidden, enc_packed):
    """One decoder step.  ids: (B,) int32.  hidden: (h0, c0) each (2, B, H)."""
    h0, c0 = hidden
    B = ids.shape[0]
    E, H = meta["E"], meta["H"]
    H4 = 4 * H
    A_pad, E_cpad, V_pad = meta["A_pad"], meta["E_cpad"], meta["V_pad"]
    gather_from_hbm = meta["gather_from_hbm"]
    f32 = jnp.float32

    inputs = (
        ids.astype(jnp.int32),       # 0  SMEM
        packed["emb_tbl"],           # 1  HBM (gather) or VMEM (tiny table)
        enc_packed,                  # 2
        jnp.asarray(h0, f32),        # 3  aliased -> output 1
        jnp.asarray(c0, f32),        # 4  aliased -> output 2
        packed["w_ace"], packed["w_h1"], packed["w_comb_h"],
        packed["w_x0"], packed["w_hh0"], packed["w_x1"],
        packed["w_out"], packed["bias"],
    )

    smem_spec = pl.BlockSpec(memory_space=pltpu.MemorySpace.SMEM)
    vmem_spec = pl.BlockSpec(memory_space=pltpu.MemorySpace.VMEM)
    hbm_spec = pl.BlockSpec(memory_space=pl.ANY)
    emb_spec = hbm_spec if gather_from_hbm else vmem_spec
    in_specs = [smem_spec, emb_spec] + [vmem_spec] * (len(inputs) - 2)

    out_shape = (
        jax.ShapeDtypeStruct((B, V_pad), f32),      # log_softmax (lane-dense, sliced outside)
        jax.ShapeDtypeStruct((2, B, H), f32),       # h (in-place with h0)
        jax.ShapeDtypeStruct((2, B, H), f32),       # c (in-place with c0)
        jax.ShapeDtypeStruct((B, A_pad), f32),      # attn_weights (lane-dense)
    )

    scratch_shapes = []
    if gather_from_hbm:
        scratch_shapes = [pltpu.VMEM((B, E), jnp.bfloat16),   # gathered embedding rows
                          pltpu.SemaphoreType.DMA((B,))]      # one DMA sem per row

    # VMEM budget from actual resident bytes, capped at half of physical VMEM (v7x: 64 MiB).
    resident = sum(x.size * x.dtype.itemsize
                   for x, spec in zip(inputs, in_specs) if spec is vmem_spec)
    resident += sum(math.prod(s.shape) * jnp.dtype(s.dtype).itemsize for s in out_shape)
    resident += B * E * 2
    try:
        vmem_cap = int(pltpu.get_tpu_info().vmem_capacity_bytes)
    except Exception:
        vmem_cap = 64 * 2**20
    vmem_limit = int(min(vmem_cap // 2, max(16 * 2**20, 2 * resident)))

    flops = 2 * B * (E * (A_pad + E_cpad) + H * (A_pad + H4) + A_pad * H
                     + H * E_cpad + E_cpad * H4 + 2 * H * H4 + H * V_pad)
    transcendentals = B * (A_pad + 8 * H + V_pad)
    cost = pl.CostEstimate(flops=int(flops), transcendentals=int(transcendentals),
                           bytes_accessed=int(resident))

    out_p, h_new, c_new, attn_w_p = pl.pallas_call(
        functools.partial(attn_decoder_kernel, gather_from_hbm),
        out_shape=out_shape,
        in_specs=in_specs,
        out_specs=(vmem_spec, vmem_spec, vmem_spec, vmem_spec),
        scratch_shapes=scratch_shapes,
        input_output_aliases={3: 1, 4: 2},   # h0 -> h, c0 -> c (in-place hidden state)
        compiler_params=pltpu.CompilerParams(vmem_limit_bytes=vmem_limit),
        cost_estimate=cost,
    )(*inputs)

    return out_p[:, :meta["V"]], (h_new, c_new), attn_w_p[:, :meta["A"]]


def init_params(key, vocab, embed_dim, hidden_dim, attn_length):
    ks = jax.random.split(key, 16)
    s = 0.1
    H4 = 4 * hidden_dim
    return {
        "embedding": s * jax.random.normal(ks[0], (vocab, embed_dim), jnp.float32),
        # nn.Linear(H+E, A)
        "w_attn": s * jax.random.normal(ks[1], (attn_length, hidden_dim + embed_dim), jnp.float32),
        "b_attn": s * jax.random.normal(ks[2], (attn_length,), jnp.float32),
        # nn.Linear(H+E, E)
        "w_comb": s * jax.random.normal(ks[3], (embed_dim, hidden_dim + embed_dim), jnp.float32),
        "b_comb": s * jax.random.normal(ks[4], (embed_dim,), jnp.float32),
        # nn.LSTM(E, H, num_layers=2): layer 0
        "w_ih0": s * jax.random.normal(ks[5], (H4, embed_dim), jnp.float32),
        "w_hh0": s * jax.random.normal(ks[6], (H4, hidden_dim), jnp.float32),
        "b_ih0": s * jax.random.normal(ks[7], (H4,), jnp.float32),
        "b_hh0": s * jax.random.normal(ks[8], (H4,), jnp.float32),
        # layer 1
        "w_ih1": s * jax.random.normal(ks[9], (H4, hidden_dim), jnp.float32),
        "w_hh1": s * jax.random.normal(ks[10], (H4, hidden_dim), jnp.float32),
        "b_ih1": s * jax.random.normal(ks[11], (H4,), jnp.float32),
        "b_hh1": s * jax.random.normal(ks[12], (H4,), jnp.float32),
        # nn.Linear(H, V)
        "w_out": s * jax.random.normal(ks[13], (vocab, hidden_dim), jnp.float32),
        "b_out": s * jax.random.normal(ks[14], (vocab,), jnp.float32),
    }


if __name__ == "__main__":
    B, V, E, H, A = 8, 64, 32, 32, 16   # batch, vocab, embed, hidden, attn_length
    key = jax.random.PRNGKey(0)
    k_par, k_ids, k_enc, k_h, k_c = jax.random.split(key, 5)

    params = init_params(k_par, V, E, H, A)
    packed, meta = prepare_params(params)             # one-time weight packing

    ids = jax.random.randint(k_ids, (B,), 0, V, dtype=jnp.int32)
    encoder_outputs = jax.random.normal(k_enc, (B, A, H), jnp.float32)
    enc_packed = prepare_encoder_outputs(encoder_outputs, meta)   # per-sequence padding
    h0 = 0.1 * jax.random.normal(k_h, (2, B, H), jnp.float32)
    c0 = 0.1 * jax.random.normal(k_c, (2, B, H), jnp.float32)

    output, (h_new, c_new), attn_w = attn_decoder_step(ids, packed, meta, (h0, c0), enc_packed)
    jax.block_until_ready((output, h_new, c_new, attn_w))

    assert output.shape == (B, V)
    assert h_new.shape == (2, B, H) and c_new.shape == (2, B, H)
    assert attn_w.shape == (B, A)
    assert bool(jnp.all(jnp.isfinite(output)))
    assert bool(jnp.allclose(jnp.sum(attn_w, axis=1), 1.0, atol=1e-2))
    print("KERNEL_OK")
</pallas_src>

<mosaic_0001>
module attributes {stable_mosaic.version = 11 : i64} {
  func.func @attn_decoder_kernel(%arg0: memref<8xi32, #tpu.memory_space<smem>>, %arg1: memref<64x32xf32, #tpu.memory_space<vmem>>, %arg2: memref<8x128x32xbf16, #tpu.memory_space<vmem>>, %arg3: memref<2x8x32xf32, #tpu.memory_space<vmem>>, %arg4: memref<2x8x32xf32, #tpu.memory_space<vmem>>, %arg5: memref<32x256xbf16, #tpu.memory_space<vmem>>, %arg6: memref<32x256xbf16, #tpu.memory_space<vmem>>, %arg7: memref<32x128xbf16, #tpu.memory_space<vmem>>, %arg8: memref<128x128xbf16, #tpu.memory_space<vmem>>, %arg9: memref<32x128xbf16, #tpu.memory_space<vmem>>, %arg10: memref<32x128xbf16, #tpu.memory_space<vmem>>, %arg11: memref<32x128xbf16, #tpu.memory_space<vmem>>, %arg12: memref<8x128xf32, #tpu.memory_space<vmem>>, %arg13: memref<8x128xf32, #tpu.memory_space<vmem>>, %arg14: memref<2x8x32xf32, #tpu.memory_space<vmem>>, %arg15: memref<2x8x32xf32, #tpu.memory_space<vmem>>, %arg16: memref<8x128xf32, #tpu.memory_space<vmem>>) attributes {dimension_semantics = [], scalar_prefetch = 0 : i64, scratch_operands = 0 : i64, tpu.core_type = #tpu.core_type<tc>} {
    %c1 = arith.constant 1 : index
    %c0 = arith.constant 0 : index
    %c0_0 = arith.constant 0 : index
    %0 = vector.load %arg3[%c1, %c0, %c0_0] : memref<2x8x32xf32, #tpu.memory_space<vmem>>, vector<1x8x32xf32>
    %1 = vector.shape_cast %0 : vector<1x8x32xf32> to vector<8x32xf32>
    %2 = arith.truncf %1 : vector<8x32xf32> to vector<8x32xbf16>
    %c0_1 = arith.constant 0 : index
    %c0_2 = arith.constant 0 : index
    %c0_3 = arith.constant 0 : index
    %3 = vector.load %arg3[%c0_1, %c0_2, %c0_3] : memref<2x8x32xf32, #tpu.memory_space<vmem>>, vector<1x8x32xf32>
    %4 = vector.shape_cast %3 : vector<1x8x32xf32> to vector<8x32xf32>
    %5 = arith.truncf %4 : vector<8x32xf32> to vector<8x32xbf16>
    %c0_4 = arith.constant 0 : index
    %c0_5 = arith.constant 0 : index
    %6 = vector.load %arg6[%c0_4, %c0_5] : memref<32x256xbf16, #tpu.memory_space<vmem>>, vector<32x256xbf16>
    %cst = arith.constant dense<0.000000e+00> : vector<8x256xf32>
    %7 = tpu.matmul %2, %6, %cst {dimension_numbers = #tpu.dot_dimension_numbers<[1], [0], [0], [1], [0, 0, 1, 1], [], []>} : vector<8x32xbf16>, vector<32x256xbf16>, vector<8x256xf32> -> vector<8x256xf32>
    %8 = vector.extract_strided_slice %7 {offsets = [0, 0], sizes = [8, 128], strides = [1, 1]} : vector<8x256xf32> to vector<8x128xf32>
    %9 = vector.extract_strided_slice %7 {offsets = [0, 128], sizes = [8, 128], strides = [1, 1]} : vector<8x256xf32> to vector<8x128xf32>
    %c0_6 = arith.constant 0 : index
    %c0_7 = arith.constant 0 : index
    %10 = vector.load %arg9[%c0_6, %c0_7] : memref<32x128xbf16, #tpu.memory_space<vmem>>, vector<32x128xbf16>
    %cst_8 = arith.constant dense<0.000000e+00> : vector<8x128xf32>
    %11 = tpu.matmul %5, %10, %cst_8 {dimension_numbers = #tpu.dot_dimension_numbers<[1], [0], [0], [1], [0, 0, 1, 1], [], []>} : vector<8x32xbf16>, vector<32x128xbf16>, vector<8x128xf32> -> vector<8x128xf32>
    %c0_9 = arith.constant 0 : index
    %12 = memref.load %arg0[%c0_9] : memref<8xi32, #tpu.memory_space<smem>>
    %c63_i32 = arith.constant 63 : i32
    %13 = arith.minsi %12, %c63_i32 : i32
    %c0_i32 = arith.constant 0 : i32
    %14 = arith.maxsi %13, %c0_i32 : i32
    %15 = arith.index_cast %14 : i32 to index
    %c0_10 = arith.constant 0 : index
    %16 = vector.load %arg1[%15, %c0_10] : memref<64x32xf32, #tpu.memory_space<vmem>>, vector<1x32xf32>
    %c1_11 = arith.constant 1 : index
    %17 = memref.load %arg0[%c1_11] : memref<8xi32, #tpu.memory_space<smem>>
    %c63_i32_12 = arith.constant 63 : i32
    %18 = arith.minsi %17, %c63_i32_12 : i32
    %c0_i32_13 = arith.constant 0 : i32
    %19 = arith.maxsi %18, %c0_i32_13 : i32
    %20 = arith.index_cast %19 : i32 to index
    %c0_14 = arith.constant 0 : index
    %21 = vector.load %arg1[%20, %c0_14] : memref<64x32xf32, #tpu.memory_space<vmem>>, vector<1x32xf32>
    %c2 = arith.constant 2 : index
    %22 = memref.load %arg0[%c2] : memref<8xi32, #tpu.memory_space<smem>>
    %c63_i32_15 = arith.constant 63 : i32
    %23 = arith.minsi %22, %c63_i32_15 : i32
    %c0_i32_16 = arith.constant 0 : i32
    %24 = arith.maxsi %23, %c0_i32_16 : i32
    %25 = arith.index_cast %24 : i32 to index
    %c0_17 = arith.constant 0 : index
    %26 = vector.load %arg1[%25, %c0_17] : memref<64x32xf32, #tpu.memory_space<vmem>>, vector<1x32xf32>
    %c3 = arith.constant 3 : index
    %27 = memref.load %arg0[%c3] : memref<8xi32, #tpu.memory_space<smem>>
    %c63_i32_18 = arith.constant 63 : i32
    %28 = arith.minsi %27, %c63_i32_18 : i32
    %c0_i32_19 = arith.constant 0 : i32
    %29 = arith.maxsi %28, %c0_i32_19 : i32
    %30 = arith.index_cast %29 : i32 to index
    %c0_20 = arith.constant 0 : index
    %31 = vector.load %arg1[%30, %c0_20] : memref<64x32xf32, #tpu.memory_space<vmem>>, vector<1x32xf32>
    %c4 = arith.constant 4 : index
    %32 = memref.load %arg0[%c4] : memref<8xi32, #tpu.memory_space<smem>>
    %c63_i32_21 = arith.constant 63 : i32
    %33 = arith.minsi %32, %c63_i32_21 : i32
    %c0_i32_22 = arith.constant 0 : i32
    %34 = arith.maxsi %33, %c0_i32_22 : i32
    %35 = arith.index_cast %34 : i32 to index
    %c0_23 = arith.constant 0 : index
    %36 = vector.load %arg1[%35, %c0_23] : memref<64x32xf32, #tpu.memory_space<vmem>>, vector<1x32xf32>
    %c5 = arith.constant 5 : index
    %37 = memref.load %arg0[%c5] : memref<8xi32, #tpu.memory_space<smem>>
    %c63_i32_24 = arith.constant 63 : i32
    %38 = arith.minsi %37, %c63_i32_24 : i32
    %c0_i32_25 = arith.constant 0 : i32
    %39 = arith.maxsi %38, %c0_i32_25 : i32
    %40 = arith.index_cast %39 : i32 to index
    %c0_26 = arith.constant 0 : index
    %41 = vector.load %arg1[%40, %c0_26] : memref<64x32xf32, #tpu.memory_space<vmem>>, vector<1x32xf32>
    %c6 = arith.constant 6 : index
    %42 = memref.load %arg0[%c6] : memref<8xi32, #tpu.memory_space<smem>>
    %c63_i32_27 = arith.constant 63 : i32
    %43 = arith.minsi %42, %c63_i32_27 : i32
    %c0_i32_28 = arith.constant 0 : i32
    %44 = arith.maxsi %43, %c0_i32_28 : i32
    %45 = arith.index_cast %44 : i32 to index
    %c0_29 = arith.constant 0 : index
    %46 = vector.load %arg1[%45, %c0_29] : memref<64x32xf32, #tpu.memory_space<vmem>>, vector<1x32xf32>
    %c7 = arith.constant 7 : index
    %47 = memref.load %arg0[%c7] : memref<8xi32, #tpu.memory_space<smem>>
    %c63_i32_30 = arith.constant 63 : i32
    %48 = arith.minsi %47, %c63_i32_30 : i32
    %c0_i32_31 = arith.constant 0 : i32
    %49 = arith.maxsi %48, %c0_i32_31 : i32
    %50 = arith.index_cast %49 : i32 to index
    %c0_32 = arith.constant 0 : index
    %51 = vector.load %arg1[%50, %c0_32] : memref<64x32xf32, #tpu.memory_space<vmem>>, vector<1x32xf32>
    %52 = tpu.concatenate %16, %21, %26, %31, %36, %41, %46, %51 in 0 : vector<1x32xf32>, vector<1x32xf32>, vector<1x32xf32>, vector<1x32xf32>, vector<1x32xf32>, vector<1x32xf32>, vector<1x32xf32>, vector<1x32xf32> -> vector<8x32xf32>
    %53 = arith.truncf %52 : vector<8x32xf32> to vector<8x32xbf16>
    %c0_33 = arith.constant 0 : index
    %c0_34 = arith.constant 0 : index
    %54 = vector.load %arg5[%c0_33, %c0_34] : memref<32x256xbf16, #tpu.memory_space<vmem>>, vector<32x256xbf16>
    %cst_35 = arith.constant dense<0.000000e+00> : vector<8x256xf32>
    %55 = tpu.matmul %53, %54, %cst_35 {dimension_numbers = #tpu.dot_dimension_numbers<[1], [0], [0], [1], [0, 0, 1, 1], [], []>} : vector<8x32xbf16>, vector<32x256xbf16>, vector<8x256xf32> -> vector<8x256xf32>
    %56 = vector.extract_strided_slice %55 {offsets = [0, 0], sizes = [8, 128], strides = [1, 1]} : vector<8x256xf32> to vector<8x128xf32>
    %57 = arith.addf %56, %8 : vector<8x128xf32>
    %c0_36 = arith.constant 0 : index
    %c0_37 = arith.constant 0 : index
    %58 = vector.load %arg12[%c0_36, %c0_37] : memref<8x128xf32, #tpu.memory_space<vmem>>, vector<1x128xf32>
    %59 = vector.broadcast %58 : vector<1x128xf32> to vector<8x128xf32>
    %60 = arith.addf %57, %59 : vector<8x128xf32>
    %cst_38 = arith.constant dense<0xFF800000> : vector<8xf32>
    %61 = vector.multi_reduction <maximumf>, %60, %cst_38 [1] : vector<8x128xf32> to vector<8xf32>
    %62 = vector.shape_cast %61 : vector<8xf32> to vector<8x1xf32>
    %63 = vector.broadcast %62 : vector<8x1xf32> to vector<8x128xf32>
    %64 = arith.subf %60, %63 : vector<8x128xf32>
    %65 = math.exp %64 : vector<8x128xf32>
    %cst_39 = arith.constant dense<0.000000e+00> : vector<8xf32>
    %66 = vector.multi_reduction <add>, %65, %cst_39 [1] : vector<8x128xf32> to vector<8xf32>
    %67 = vector.shape_cast %66 : vector<8xf32> to vector<8x1xf32>
    %68 = tpu.reciprocal %67 {approx = true} : vector<8x1xf32> -> vector<8x1xf32>
    %69 = vector.broadcast %68 : vector<8x1xf32> to vector<8x128xf32>
    %70 = arith.mulf %65, %69 : vector<8x128xf32>
    %c0_40 = arith.constant 0 : index
    %c0_41 = arith.constant 0 : index
    %71 = vector.load %arg16[%c0_40, %c0_41] : memref<8x128xf32, #tpu.memory_space<vmem>>, vector<8x128xf32>
    tpu.vector_store %arg16[%c0_40, %c0_41], %70 {strides = array<i32>} : memref<8x128xf32, #tpu.memory_space<vmem>>, vector<8x128xf32>,
    %72 = arith.truncf %70 : vector<8x128xf32> to vector<8x128xbf16>
    %73 = vector.shape_cast %72 : vector<8x128xbf16> to vector<8x1x128xbf16>
    %c0_42 = arith.constant 0 : index
    %c0_43 = arith.constant 0 : index
    %c0_44 = arith.constant 0 : index
    %74 = vector.load %arg2[%c0_42, %c0_43, %c0_44] : memref<8x128x32xbf16, #tpu.memory_space<vmem>>, vector<8x128x32xbf16>
    "tpu.trace_start"() <{level = 10 : i32, message = "bqa,bah->bqh"}> : () -> ()
    %cst_45 = arith.constant dense<0.000000e+00> : vector<8x1x32xf32>
    %75 = tpu.matmul %73, %74, %cst_45 {dimension_numbers = #tpu.dot_dimension_numbers<[2], [1], [1], [2], [0, 0, 0, 1, 1, 2], [0], [0]>} : vector<8x1x128xbf16>, vector<8x128x32xbf16>, vector<8x1x32xf32> -> vector<8x1x32xf32>
    "tpu.trace_stop"() : () -> ()
    %76 = vector.shape_cast %75 : vector<8x1x32xf32> to vector<8x32xf32>
    %77 = vector.extract_strided_slice %55 {offsets = [0, 128], sizes = [8, 128], strides = [1, 1]} : vector<8x256xf32> to vector<8x128xf32>
    %78 = arith.truncf %76 : vector<8x32xf32> to vector<8x32xbf16>
    %c0_46 = arith.constant 0 : index
    %c0_47 = arith.constant 0 : index
    %79 = vector.load %arg7[%c0_46, %c0_47] : memref<32x128xbf16, #tpu.memory_space<vmem>>, vector<32x128xbf16>
    %cst_48 = arith.constant dense<0.000000e+00> : vector<8x128xf32>
    %80 = tpu.matmul %78, %79, %cst_48 {dimension_numbers = #tpu.dot_dimension_numbers<[1], [0], [0], [1], [0, 0, 1, 1], [], []>} : vector<8x32xbf16>, vector<32x128xbf16>, vector<8x128xf32> -> vector<8x128xf32>
    %81 = arith.addf %77, %80 : vector<8x128xf32>
    %c1_49 = arith.constant 1 : index
    %c0_50 = arith.constant 0 : index
    %82 = vector.load %arg12[%c1_49, %c0_50] : memref<8x128xf32, #tpu.memory_space<vmem>>, vector<1x128xf32>
    %83 = vector.broadcast %82 : vector<1x128xf32> to vector<8x128xf32>
    %84 = arith.addf %81, %83 : vector<8x128xf32>
    %85 = arith.truncf %84 : vector<8x128xf32> to vector<8x128xbf16>
    %c0_51 = arith.constant 0 : index
    %c0_52 = arith.constant 0 : index
    %86 = vector.load %arg8[%c0_51, %c0_52] : memref<128x128xbf16, #tpu.memory_space<vmem>>, vector<128x128xbf16>
    %cst_53 = arith.constant dense<0.000000e+00> : vector<8x128xf32>
    %87 = tpu.matmul %85, %86, %cst_53 {dimension_numbers = #tpu.dot_dimension_numbers<[1], [0], [0], [1], [0, 0, 1, 1], [], []>} : vector<8x128xbf16>, vector<128x128xbf16>, vector<8x128xf32> -> vector<8x128xf32>
    %88 = arith.addf %87, %11 : vector<8x128xf32>
    %c2_54 = arith.constant 2 : index
    %c0_55 = arith.constant 0 : index
    %89 = vector.load %arg12[%c2_54, %c0_55] : memref<8x128xf32, #tpu.memory_space<vmem>>, vector<1x128xf32>
    %90 = vector.broadcast %89 : vector<1x128xf32> to vector<8x128xf32>
    %91 = arith.addf %88, %90 : vector<8x128xf32>
    %c0_56 = arith.constant 0 : index
    %c0_57 = arith.constant 0 : index
    %c0_58 = arith.constant 0 : index
    %92 = vector.load %arg4[%c0_56, %c0_57, %c0_58] : memref<2x8x32xf32, #tpu.memory_space<vmem>>, vector<1x8x32xf32>
    %93 = vector.shape_cast %92 : vector<1x8x32xf32> to vector<8x32xf32>
    %94 = vector.extract_strided_slice %91 {offsets = [0, 0], sizes = [8, 32], strides = [1, 1]} : vector<8x128xf32> to vector<8x32xf32>
    %95 = arith.negf %94 : vector<8x32xf32>
    %96 = math.exp %95 : vector<8x32xf32>
    %cst_59 = arith.constant 1.000000e+00 : f32
    %97 = vector.broadcast %cst_59 : f32 to vector<8x32xf32>
    %98 = arith.addf %97, %96 : vector<8x32xf32>
    %99 = arith.divf %97, %98 : vector<8x32xf32>
    %100 = vector.extract_strided_slice %91 {offsets = [0, 32], sizes = [8, 32], strides = [1, 1]} : vector<8x128xf32> to vector<8x32xf32>
    %101 = arith.negf %100 : vector<8x32xf32>
    %102 = math.exp %101 : vector<8x32xf32>
    %cst_60 = arith.constant 1.000000e+00 : f32
    %103 = vector.broadcast %cst_60 : f32 to vector<8x32xf32>
    %104 = arith.addf %103, %102 : vector<8x32xf32>
    %105 = arith.divf %103, %104 : vector<8x32xf32>
    %106 = vector.extract_strided_slice %91 {offsets = [0, 64], sizes = [8, 32], strides = [1, 1]} : vector<8x128xf32> to vector<8x32xf32>
    %107 = math.tanh %106 : vector<8x32xf32>
    %108 = vector.extract_strided_slice %91 {offsets = [0, 96], sizes = [8, 32], strides = [1, 1]} : vector<8x128xf32> to vector<8x32xf32>
    %109 = arith.negf %108 : vector<8x32xf32>
    %110 = math.exp %109 : vector<8x32xf32>
    %cst_61 = arith.constant 1.000000e+00 : f32
    %111 = vector.broadcast %cst_61 : f32 to vector<8x32xf32>
    %112 = arith.addf %111, %110 : vector<8x32xf32>
    %113 = arith.divf %111, %112 : vector<8x32xf32>
    %114 = arith.mulf %105, %93 : vector<8x32xf32>
    %115 = arith.mulf %99, %107 : vector<8x32xf32>
    %116 = arith.addf %114, %115 : vector<8x32xf32>
    %117 = math.tanh %116 : vector<8x32xf32>
    %118 = arith.mulf %113, %117 : vector<8x32xf32>
    %119 = arith.truncf %118 : vector<8x32xf32> to vector<8x32xbf16>
    %c0_62 = arith.constant 0 : index
    %c0_63 = arith.constant 0 : index
    %120 = vector.load %arg10[%c0_62, %c0_63] : memref<32x128xbf16, #tpu.memory_space<vmem>>, vector<32x128xbf16>
    %cst_64 = arith.constant dense<0.000000e+00> : vector<8x128xf32>
    %121 = tpu.matmul %119, %120, %cst_64 {dimension_numbers = #tpu.dot_dimension_numbers<[1], [0], [0], [1], [0, 0, 1, 1], [], []>} : vector<8x32xbf16>, vector<32x128xbf16>, vector<8x128xf32> -> vector<8x128xf32>
    %122 = arith.addf %121, %9 : vector<8x128xf32>
    %c3_65 = arith.constant 3 : index
    %c0_66 = arith.constant 0 : index
    %123 = vector.load %arg12[%c3_65, %c0_66] : memref<8x128xf32, #tpu.memory_space<vmem>>, vector<1x128xf32>
    %124 = vector.broadcast %123 : vector<1x128xf32> to vector<8x128xf32>
    %125 = arith.addf %122, %124 : vector<8x128xf32>
    %c1_67 = arith.constant 1 : index
    %c0_68 = arith.constant 0 : index
    %c0_69 = arith.constant 0 : index
    %126 = vector.load %arg4[%c1_67, %c0_68, %c0_69] : memref<2x8x32xf32, #tpu.memory_space<vmem>>, vector<1x8x32xf32>
    %127 = vector.shape_cast %126 : vector<1x8x32xf32> to vector<8x32xf32>
    %128 = vector.extract_strided_slice %125 {offsets = [0, 0], sizes = [8, 32], strides = [1, 1]} : vector<8x128xf32> to vector<8x32xf32>
    %129 = arith.negf %128 : vector<8x32xf32>
    %130 = math.exp %129 : vector<8x32xf32>
    %cst_70 = arith.constant 1.000000e+00 : f32
    %131 = vector.broadcast %cst_70 : f32 to vector<8x32xf32>
    %132 = arith.addf %131, %130 : vector<8x32xf32>
    %133 = arith.divf %131, %132 : vector<8x32xf32>
    %134 = vector.extract_strided_slice %125 {offsets = [0, 32], sizes = [8, 32], strides = [1, 1]} : vector<8x128xf32> to vector<8x32xf32>
    %135 = arith.negf %134 : vector<8x32xf32>
    %136 = math.exp %135 : vector<8x32xf32>
    %cst_71 = arith.constant 1.000000e+00 : f32
    %137 = vector.broadcast %cst_71 : f32 to vector<8x32xf32>
    %138 = arith.addf %137, %136 : vector<8x32xf32>
    %139 = arith.divf %137, %138 : vector<8x32xf32>
    %140 = vector.extract_strided_slice %125 {offsets = [0, 64], sizes = [8, 32], strides = [1, 1]} : vector<8x128xf32> to vector<8x32xf32>
    %141 = math.tanh %140 : vector<8x32xf32>
    %142 = vector.extract_strided_slice %125 {offsets = [0, 96], sizes = [8, 32], strides = [1, 1]} : vector<8x128xf32> to vector<8x32xf32>
    %143 = arith.negf %142 : vector<8x32xf32>
    %144 = math.exp %143 : vector<8x32xf32>
    %cst_72 = arith.constant 1.000000e+00 : f32
    %145 = vector.broadcast %cst_72 : f32 to vector<8x32xf32>
    %146 = arith.addf %145, %144 : vector<8x32xf32>
    %147 = arith.divf %145, %146 : vector<8x32xf32>
    %148 = arith.mulf %139, %127 : vector<8x32xf32>
    %149 = arith.mulf %133, %141 : vector<8x32xf32>
    %150 = arith.addf %148, %149 : vector<8x32xf32>
    %151 = math.tanh %150 : vector<8x32xf32>
    %152 = arith.mulf %147, %151 : vector<8x32xf32>
    %153 = arith.truncf %152 : vector<8x32xf32> to vector<8x32xbf16>
    %c0_73 = arith.constant 0 : index
    %c0_74 = arith.constant 0 : index
    %154 = vector.load %arg11[%c0_73, %c0_74] : memref<32x128xbf16, #tpu.memory_space<vmem>>, vector<32x128xbf16>
    %cst_75 = arith.constant dense<0.000000e+00> : vector<8x128xf32>
    %155 = tpu.matmul %153, %154, %cst_75 {dimension_numbers = #tpu.dot_dimension_numbers<[1], [0], [0], [1], [0, 0, 1, 1], [], []>} : vector<8x32xbf16>, vector<32x128xbf16>, vector<8x128xf32> -> vector<8x128xf32>
    %c4_76 = arith.constant 4 : index
    %c0_77 = arith.constant 0 : index
    %156 = vector.load %arg12[%c4_76, %c0_77] : memref<8x128xf32, #tpu.memory_space<vmem>>, vector<1x128xf32>
    %157 = vector.broadcast %156 : vector<1x128xf32> to vector<8x128xf32>
    %158 = arith.addf %155, %157 : vector<8x128xf32>
    %cst_78 = arith.constant dense<0xFF800000> : vector<8xf32>
    %159 = vector.multi_reduction <maximumf>, %158, %cst_78 [1] : vector<8x128xf32> to vector<8xf32>
    %160 = vector.shape_cast %159 : vector<8xf32> to vector<8x1xf32>
    %161 = vector.broadcast %160 : vector<8x1xf32> to vector<8x128xf32>
    %162 = arith.subf %158, %161 : vector<8x128xf32>
    %163 = math.exp %162 : vector<8x128xf32>
    %cst_79 = arith.constant dense<0.000000e+00> : vector<8xf32>
    %164 = vector.multi_reduction <add>, %163, %cst_79 [1] : vector<8x128xf32> to vector<8xf32>
    %165 = vector.shape_cast %164 : vector<8xf32> to vector<8x1xf32>
    %166 = math.log %165 : vector<8x1xf32>
    %167 = arith.addf %166, %160 : vector<8x1xf32>
    %168 = vector.broadcast %167 : vector<8x1xf32> to vector<8x128xf32>
    %169 = arith.subf %158, %168 : vector<8x128xf32>
    %c0_80 = arith.constant 0 : index
    %c0_81 = arith.constant 0 : index
    %170 = vector.load %arg13[%c0_80, %c0_81] : memref<8x128xf32, #tpu.memory_space<vmem>>, vector<8x128xf32>
    tpu.vector_store %arg13[%c0_80, %c0_81], %169 {strides = array<i32>} : memref<8x128xf32, #tpu.memory_space<vmem>>, vector<8x128xf32>,
    %c0_82 = arith.constant 0 : index
    %c0_83 = arith.constant 0 : index
    %c0_84 = arith.constant 0 : index
    %171 = vector.load %arg14[%c0_82, %c0_83, %c0_84] : memref<2x8x32xf32, #tpu.memory_space<vmem>>, vector<1x8x32xf32>
    %172 = vector.shape_cast %171 : vector<1x8x32xf32> to vector<8x32xf32>
    %173 = vector.shape_cast %118 : vector<8x32xf32> to vector<1x8x32xf32>
    tpu.vector_store %arg14[%c0_82, %c0_83, %c0_84], %173 {strides = array<i32>} : memref<2x8x32xf32, #tpu.memory_space<vmem>>, vector<1x8x32xf32>,
    %c1_85 = arith.constant 1 : index
    %c0_86 = arith.constant 0 : index
    %c0_87 = arith.constant 0 : index
    %174 = vector.load %arg14[%c1_85, %c0_86, %c0_87] : memref<2x8x32xf32, #tpu.memory_space<vmem>>, vector<1x8x32xf32>
    %175 = vector.shape_cast %174 : vector<1x8x32xf32> to vector<8x32xf32>
    %176 = vector.shape_cast %152 : vector<8x32xf32> to vector<1x8x32xf32>
    tpu.vector_store %arg14[%c1_85, %c0_86, %c0_87], %176 {strides = array<i32>} : memref<2x8x32xf32, #tpu.memory_space<vmem>>, vector<1x8x32xf32>,
    %c0_88 = arith.constant 0 : index
    %c0_89 = arith.constant 0 : index
    %c0_90 = arith.constant 0 : index
    %177 = vector.load %arg15[%c0_88, %c0_89, %c0_90] : memref<2x8x32xf32, #tpu.memory_space<vmem>>, vector<1x8x32xf32>
    %178 = vector.shape_cast %177 : vector<1x8x32xf32> to vector<8x32xf32>
    %179 = vector.shape_cast %116 : vector<8x32xf32> to vector<1x8x32xf32>
    tpu.vector_store %arg15[%c0_88, %c0_89, %c0_90], %179 {strides = array<i32>} : memref<2x8x32xf32, #tpu.memory_space<vmem>>, vector<1x8x32xf32>,
    %c1_91 = arith.constant 1 : index
    %c0_92 = arith.constant 0 : index
    %c0_93 = arith.constant 0 : index
    %180 = vector.load %arg15[%c1_91, %c0_92, %c0_93] : memref<2x8x32xf32, #tpu.memory_space<vmem>>, vector<1x8x32xf32>
    %181 = vector.shape_cast %180 : vector<1x8x32xf32> to vector<8x32xf32>
    %182 = vector.shape_cast %150 : vector<8x32xf32> to vector<1x8x32xf32>
    tpu.vector_store %arg15[%c1_91, %c0_92, %c0_93], %182 {strides = array<i32>} : memref<2x8x32xf32, #tpu.memory_space<vmem>>, vector<1x8x32xf32>,
    return
  }
}

</mosaic_0001>

<llo_original>
// kernel: tpu_custom_call.1
$region0: #{tpu_custom_call.1}
  #allocation0 [shape = 'u32[]', space=smem, size = 0x4, offset = 0x4, fixed_abs, tag = 'smem constant byte address 0x4 - core index']
  #allocation1 [shape = 'u32[72,128]{1,0:T(1,128)}', space=vmem, size = 0x9000, scoped, tag = 'internal scratch']
  %s0 = inlined_call_operand.vmem [shape: s32[8], index: 0, kind: input, shape index: {}]
  %s1 = inlined_call_operand.vmem [shape: f32[64,32], index: 1, kind: input, shape index: {}]
  %s2 = inlined_call_operand.vmem [shape: bf16[8,128,32], index: 2, kind: input, shape index: {}]
  %s3 = inlined_call_operand.hbm [shape: f32[2,8,32], index: 3, kind: input, shape index: {}, may-alias: {3,14}]
  %s4 = inlined_call_operand.hbm [shape: f32[2,8,32], index: 4, kind: input, shape index: {}, may-alias: {4,15}]
  %s5 = inlined_call_operand.vmem [shape: bf16[32,256], index: 5, kind: input, shape index: {}]
  %s6 = inlined_call_operand.vmem [shape: bf16[32,256], index: 6, kind: input, shape index: {}]
  %s7 = inlined_call_operand.vmem [shape: bf16[32,128], index: 7, kind: input, shape index: {}]
  %s8 = inlined_call_operand.vmem [shape: bf16[128,128], index: 8, kind: input, shape index: {}]
  %s9 = inlined_call_operand.vmem [shape: bf16[32,128], index: 9, kind: input, shape index: {}]
  %s10 = inlined_call_operand.vmem [shape: bf16[32,128], index: 10, kind: input, shape index: {}]
  %s11 = inlined_call_operand.vmem [shape: bf16[32,128], index: 11, kind: input, shape index: {}]
  %s12 = inlined_call_operand.vmem [shape: f32[8,128], index: 12, kind: input, shape index: {}]
  %s13 = inlined_call_operand.hbm [shape: f32[8,128], index: 13, kind: output, shape index: {0}]
  %s14 = inlined_call_operand.hbm [shape: f32[2,8,32], index: 14, kind: output, shape index: {1}, may-alias: {3,14}]
  %s15 = inlined_call_operand.hbm [shape: f32[2,8,32], index: 15, kind: output, shape index: {2}, may-alias: {4,15}]
  %s16 = inlined_call_operand.hbm [shape: f32[8,128], index: 16, kind: output, shape index: {3}]
  %17 = xla_tuple %s13, %s14, %s15, %s16
  %s18 = sld [smem:[#allocation0]]
  $region98: #{tpu_custom_call.1} parent=0
    _
  %s20 = ssub.s32 1, %s18
  %s21 = scalar_select 0, %s20, %s18
  $region1: #{tpu_custom_call.1} parent=0
    #allocation2 [shape = 'u8[512]{0}', space=smem, size = 0x200, scoped, tag = 'input window, operand 0, single buffered']
    #allocation3 [shape = 's32[1]{0}', space=sflag, size = 0x4, scoped, tag = 'scoped memory for tpu_custom_call.1']
    #allocation4 [shape = 's32[1]{0}', space=sflag, size = 0x4, scoped, tag = 'scoped memory for tpu_custom_call.1']
    #allocation5 [shape = 's32[1]{0}', space=sflag, size = 0x4, scoped, tag = 'scoped memory for tpu_custom_call.1']
    #allocation6 [shape = 'u8[8192]{0}', space=vmem, size = 0x2000, scoped, tag = 'input window, operand 3, single buffered']
    #allocation7 [shape = 'u8[8192]{0}', space=vmem, size = 0x2000, scoped, tag = 'input window, operand 4, single buffered']
    #allocation8 [shape = 's32[1]{0}', space=sflag, size = 0x4, scoped, tag = 'scoped memory for tpu_custom_call.1']
    #allocation9 [shape = 'u8[4096]{0}', space=vmem, size = 0x1000, scoped, tag = 'output window, operand 0, single buffered']
    #allocation10 [shape = 'u8[8192]{0}', space=vmem, size = 0x2000, scoped, tag = 'output window, operand 1, single buffered']
    #allocation11 [shape = 's32[1]{0}', space=sflag, size = 0x4, scoped, tag = 'scoped memory for tpu_custom_call.1']
    #allocation12 [shape = 'u8[8192]{0}', space=vmem, size = 0x2000, scoped, tag = 'output window, operand 2, single buffered']
    #allocation13 [shape = 'u8[4096]{0}', space=vmem, size = 0x1000, scoped, tag = 'output window, operand 3, single buffered']
    #allocation14 [shape = 's32[1]{0}', space=sflag, size = 0x4, scoped, tag = 'scoped memory for tpu_custom_call.1']
    %22 = vsyncpa [#allocation5], 0
    %23 = vsyncpa [#allocation3], 0
    %24 = vsyncpa [#allocation8], 0
    %25 = vsyncpa [#allocation4], 0
    %26 = vsyncpa [#allocation11], 0
    %27 = vsyncpa [#allocation14], 0
    // Predicated region
    $region2: #{tpu_custom_call.1} parent=1 // pred_check
      _
    $region3: #{tpu_custom_call.1} parent=1 // pred_check_branch
      %29 = sbr.rel (0) target = $region5
    $region4: #{tpu_custom_call.1} parent=1 // pred_region
      %31 = vsyncadd [#allocation5], 0
      %s33 = sshll.u32 %s0, 4
      %s34 = int_to_ptr.vmem [resolvable:$true] %s33
      %36 = dma.vmem_to_smem %s34, 16, [#allocation2], [#allocation5]
    $region5: #{tpu_custom_call.1} parent=1 // pred_fallthru
      _
    // Predicated region
    $region6: #{tpu_custom_call.1} parent=1 // pred_check
      _
    $region7: #{tpu_custom_call.1} parent=1 // pred_check_branch
      %38 = sbr.rel (0) target = $region9
    $region8: #{tpu_custom_call.1} parent=1 // pred_region
      _
    $region9: #{tpu_custom_call.1} parent=1 // pred_fallthru
      _
    // Predicated region
    $region10: #{tpu_custom_call.1} parent=1 // pred_check
      _
    $region11: #{tpu_custom_call.1} parent=1 // pred_check_branch
      %40 = sbr.rel (0) target = $region13
    $region12: #{tpu_custom_call.1} parent=1 // pred_region
      _
    $region13: #{tpu_custom_call.1} parent=1 // pred_fallthru
      _
    // Predicated region
    $region14: #{tpu_custom_call.1} parent=1 // pred_check
      _
    $region15: #{tpu_custom_call.1} parent=1 // pred_check_branch
      %42 = sbr.rel (0) target = $region17
    $region16: #{tpu_custom_call.1} parent=1 // pred_region
      %44 = vsyncadd [#allocation3], 0
      %s45 = sshll.u32 %s3, 4
      %s46 = int_to_ptr.hbm [resolvable:$true] %s45
      %s47 = sshll.u32 [#allocation6], 4
      %s48 = int_to_ptr.vmem [resolvable:$true] %s47
      %53 = dma.hbm_to_vmem [thread:$0]  %s46, 256, %s48, [#allocation3], 128, 128, 8
    $region17: #{tpu_custom_call.1} parent=1 // pred_fallthru
      _
    // Predicated region
    $region18: #{tpu_custom_call.1} parent=1 // pred_check
      _
    $region19: #{tpu_custom_call.1} parent=1 // pred_check_branch
      %55 = sbr.rel (0) target = $region21
    $region20: #{tpu_custom_call.1} parent=1 // pred_region
      %57 = vsyncadd [#allocation8], 0
      %s58 = sshll.u32 %s4, 4
      %s59 = int_to_ptr.hbm [resolvable:$true] %s58
      %s60 = sshll.u32 [#allocation7], 4
      %s61 = int_to_ptr.vmem [resolvable:$true] %s60
      %66 = dma.hbm_to_vmem [thread:$0]  %s59, 256, %s61, [#allocation8], 128, 128, 8
    $region21: #{tpu_custom_call.1} parent=1 // pred_fallthru
      _
    // Predicated region
    $region22: #{tpu_custom_call.1} parent=1 // pred_check
      _
    $region23: #{tpu_custom_call.1} parent=1 // pred_check_branch
      %68 = sbr.rel (0) target = $region25
    $region24: #{tpu_custom_call.1} parent=1 // pred_region
      _
    $region25: #{tpu_custom_call.1} parent=1 // pred_fallthru
      _
    // Predicated region
    $region26: #{tpu_custom_call.1} parent=1 // pred_check
      _
    $region27: #{tpu_custom_call.1} parent=1 // pred_check_branch
      %70 = sbr.rel (0) target = $region29
    $region28: #{tpu_custom_call.1} parent=1 // pred_region
      _
    $region29: #{tpu_custom_call.1} parent=1 // pred_fallthru
      _
    // Predicated region
    $region30: #{tpu_custom_call.1} parent=1 // pred_check
      _
    $region31: #{tpu_custom_call.1} parent=1 // pred_check_branch
      %72 = sbr.rel (0) target = $region33
    $region32: #{tpu_custom_call.1} parent=1 // pred_region
      _
    $region33: #{tpu_custom_call.1} parent=1 // pred_fallthru
      _
    // Predicated region
    $region34: #{tpu_custom_call.1} parent=1 // pred_check
      _
    $region35: #{tpu_custom_call.1} parent=1 // pred_check_branch
      %74 = sbr.rel (0) target = $region37
    $region36: #{tpu_custom_call.1} parent=1 // pred_region
      _
    $region37: #{tpu_custom_call.1} parent=1 // pred_fallthru
      _
    // Predicated region
    $region38: #{tpu_custom_call.1} parent=1 // pred_check
      _
    $region39: #{tpu_custom_call.1} parent=1 // pred_check_branch
      %76 = sbr.rel (0) target = $region41
    $region40: #{tpu_custom_call.1} parent=1 // pred_region
      _
    $region41: #{tpu_custom_call.1} parent=1 // pred_fallthru
      _
    // Predicated region
    $region42: #{tpu_custom_call.1} parent=1 // pred_check
      _
    $region43: #{tpu_custom_call.1} parent=1 // pred_check_branch
      %78 = sbr.rel (0) target = $region45
    $region44: #{tpu_custom_call.1} parent=1 // pred_region
      _
    $region45: #{tpu_custom_call.1} parent=1 // pred_fallthru
      _
    // Predicated region
    $region46: #{tpu_custom_call.1} parent=1 // pred_check
      _
    $region47: #{tpu_custom_call.1} parent=1 // pred_check_branch
      %80 = sbr.rel (0) target = $region49
    $region48: #{tpu_custom_call.1} parent=1 // pred_region
      _
    $region49: #{tpu_custom_call.1} parent=1 // pred_fallthru
      _
    // Predicated region
    $region50: #{tpu_custom_call.1} parent=1 // pred_check
      _
    $region51: #{tpu_custom_call.1} parent=1 // pred_check_branch
      %82 = sbr.rel (0) target = $region53
    $region52: #{tpu_custom_call.1} parent=1 // pred_region
      _
    $region53: #{tpu_custom_call.1} parent=1 // pred_fallthru
      _
    // Predicated region
    $region54: #{tpu_custom_call.1} parent=1 // pred_check
      _
    $region55: #{tpu_custom_call.1} parent=1 // pred_check_branch
      %84 = sbr.rel (0) target = $region57
    $region56: #{tpu_custom_call.1} parent=1 // pred_region
      %86 = dma.done [#allocation5], 16
    $region57: #{tpu_custom_call.1} parent=1 // pred_fallthru
      _
    // Predicated region
    $region58: #{tpu_custom_call.1} parent=1 // pred_check
      _
    $region59: #{tpu_custom_call.1} parent=1 // pred_check_branch
      %88 = sbr.rel (0) target = $region61
    $region60: #{tpu_custom_call.1} parent=1 // pred_region
      %90 = dma.done [#allocation3], 256
    $region61: #{tpu_custom_call.1} parent=1 // pred_fallthru
      _
    // Predicated region
    $region62: #{tpu_custom_call.1} parent=1 // pred_check
      _
    $region63: #{tpu_custom_call.1} parent=1 // pred_check_branch
      %92 = sbr.rel (0) target = $region65
    $region64: #{tpu_custom_call.1} parent=1 // pred_region
      %94 = dma.done [#allocation8], 256
    $region65: #{tpu_custom_call.1} parent=1 // pred_fallthru
      _
    %95 = sfence
    %s97 = scalar_lea.vmem [#allocation6], 8
    %v98 = vld [vmem:[%s97] sm:$0xff]
    %v99 = vpack.c.bf16 %v98, %v98
    %v100 = vld [vmem:[#allocation6] sm:$0xff]
    %v101 = vpack.c.bf16 %v100, %v100
    %v102 = vld [vmem:[%s6] sm:$0xff]
    %v103 = vld [vmem:[%s6 + $0x8] sm:$0xff]
    %v104 = vld [vmem:[%s6 + $0x10] sm:$0xff]
    %v105 = vld [vmem:[%s6 + $0x18] sm:$0xff]
    %v110 = vunpack.c.l.b16 %v102
    %v111 = vunpack.c.h.b16 %v102
    %v112 = vunpack.c.l.b16 %v103
    %v113 = vunpack.c.h.b16 %v103
    %v114 = vunpack.c.l.b16 %v104
    %v115 = vunpack.c.h.b16 %v104
    %v116 = vunpack.c.l.b16 %v105
    %v117 = vunpack.c.h.b16 %v105
    %v118 = vpack.c.b16 %v112, %v110
    %v119 = vpack.c.b16 %v113, %v111
    %v120 = vpack.c.b16 %v116, %v114
    %v121 = vpack.c.b16 %v117, %v115
    %vm126 = vcmask 261120
    %v128 = vsel %vm126, %v99, 0
    %130 = vmatpush.bf16.msra.mxu0 0
    %131 = vmatpush.bf16.msra.mxu0 0
    %132 = vmatpush.bf16.msra.mxu0 0
    %133 = vmatpush.bf16.msra.mxu0 0
    %134 = vmatpush.bf16.msra.mxu0 0
    %135 = vmatpush.bf16.msra.mxu0 0
    %136 = vmatpush.bf16.msra.mxu0 %v120
    %137 = vmatpush.bf16.msra.mxu0 %v118
    %138 = vmatmul.bf16.gmra.mxu0 %v128
    %v139 = vpop.f32.mrf.mxu0
    %v140 = vadd.f32 0.0, %v139
    %v141 = vpop.f32.mrf.mxu0
    %142 = vdwg.mxu0
    %143 = vmatpush.bf16.msra.mxu0 0
    %144 = vmatpush.bf16.msra.mxu0 0
    %145 = vmatpush.bf16.msra.mxu0 0
    %146 = vmatpush.bf16.msra.mxu0 0
    %147 = vmatpush.bf16.msra.mxu0 0
    %148 = vmatpush.bf16.msra.mxu0 0
    %149 = vmatpush.bf16.msra.mxu0 %v121
    %150 = vmatpush.bf16.msra.mxu0 %v119
    %151 = vmatmul.bf16.gmra.mxu0 %v128
    %v152 = vpop.f32.mrf.mxu0
    %v153 = vadd.f32 0.0, %v152
    %v154 = vpop.f32.mrf.mxu0
    %155 = vdwg.mxu0
    %v156 = vld [vmem:[%s9] sm:$0xf]
    %v157 = vld [vmem:[%s9 + $0x4] sm:$0xf]
    %v158 = vld [vmem:[%s9 + $0x8] sm:$0xf]
    %v159 = vld [vmem:[%s9 + $0xc] sm:$0xf]
    %v164 = vunpack.c.l.b16 %v156
    %v165 = vunpack.c.l.b16 %v157
    %v166 = vunpack.c.l.b16 %v158
    %v167 = vunpack.c.l.b16 %v159
    %v168 = vpack.c.b16 %v165, %v164
    %v169 = vpack.c.b16 %v167, %v166
    %v173 = vsel %vm126, %v101, 0
    %175 = vmatpush.bf16.msra.mxu0 0
    %176 = vmatpush.bf16.msra.mxu0 0
    %177 = vmatpush.bf16.msra.mxu0 0
    %178 = vmatpush.bf16.msra.mxu0 0
    %179 = vmatpush.bf16.msra.mxu0 0
    %180 = vmatpush.bf16.msra.mxu0 0
    %181 = vmatpush.bf16.msra.mxu0 %v169
    %182 = vmatpush.bf16.msra.mxu0 %v168
    %183 = vmatmul.bf16.gmra.mxu0 %v173
    %v184 = vpop.f32.mrf.mxu0
    %v185 = vadd.f32 0.0, %v184
    %v186 = vpop.f32.mrf.mxu0
    %187 = vdwg.mxu0
    %s188 = sld [smem:[#allocation2]]
    %p189 = scmp.lt.s32.totalorder %s188, 63
    %s190 = scalar_select %p189, %s188, 63
    %p191 = scmp.gt.s32.totalorder %s190, 0
    %s192 = scalar_select %p191, %s190, 0
    %s193 = scalar_lea.vmem %s1, %s192
    %v194 = vld [vmem:[%s193] sm:$0x1]
    %s195 = sld [smem:[#allocation2 + $0x1]]
    %p196 = scmp.lt.s32.totalorder %s195, 63
    %s197 = scalar_select %p196, %s195, 63
    %p198 = scmp.gt.s32.totalorder %s197, 0
    %s199 = scalar_select %p198, %s197, 0
    %s200 = scalar_lea.vmem %s1, %s199
    %v201 = vld [vmem:[%s200] sm:$0x1]
    %s202 = sld [smem:[#allocation2 + $0x2]]
    %p203 = scmp.lt.s32.totalorder %s202, 63
    %s204 = scalar_select %p203, %s202, 63
    %p205 = scmp.gt.s32.totalorder %s204, 0
    %s206 = scalar_select %p205, %s204, 0
    %s207 = scalar_lea.vmem %s1, %s206
    %v208 = vld [vmem:[%s207] sm:$0x1]
    %s209 = sld [smem:[#allocation2 + $0x3]]
    %p210 = scmp.lt.s32.totalorder %s209, 63
    %s211 = scalar_select %p210, %s209, 63
    %p212 = scmp.gt.s32.totalorder %s211, 0
    %s213 = scalar_select %p212, %s211, 0
    %s214 = scalar_lea.vmem %s1, %s213
    %v215 = vld [vmem:[%s214] sm:$0x1]
    %s216 = sld [smem:[#allocation2 + $0x4]]
    %p217 = scmp.lt.s32.totalorder %s216, 63
    %s218 = scalar_select %p217, %s216, 63
    %p219 = scmp.gt.s32.totalorder %s218, 0
    %s220 = scalar_select %p219, %s218, 0
    %s221 = scalar_lea.vmem %s1, %s220
    %v222 = vld [vmem:[%s221] sm:$0x1]
    %s223 = sld [smem:[#allocation2 + $0x5]]
    %p224 = scmp.lt.s32.totalorder %s223, 63
    %s225 = scalar_select %p224, %s223, 63
    %p226 = scmp.gt.s32.totalorder %s225, 0
    %s227 = scalar_select %p226, %s225, 0
    %s228 = scalar_lea.vmem %s1, %s227
    %v229 = vld [vmem:[%s228] sm:$0x1]
    %s230 = sld [smem:[#allocation2 + $0x6]]
    %p231 = scmp.lt.s32.totalorder %s230, 63
    %s232 = scalar_select %p231, %s230, 63
    %p233 = scmp.gt.s32.totalorder %s232, 0
    %s234 = scalar_select %p233, %s232, 0
    %s235 = scalar_lea.vmem %s1, %s234
    %v236 = vld [vmem:[%s235] sm:$0x1]
    %s237 = sld [smem:[#allocation2 + $0x7]]
    %p238 = scmp.lt.s32.totalorder %s237, 63
    %s239 = scalar_select %p238, %s237, 63
    %p240 = scmp.gt.s32.totalorder %s239, 0
    %s241 = scalar_select %p240, %s239, 0
    %s242 = scalar_lea.vmem %s1, %s241
    %v243 = vld [vmem:[%s242] sm:$0x1]
    %v245 = vrot.slane %v201, 7
    %v248 = vrot.slane %v208, 6
    %v251 = vrot.slane %v215, 5
    %v254 = vrot.slane %v222, 4
    %v257 = vrot.slane %v229, 3
    %v260 = vrot.slane %v236, 2
    %v263 = vrot.slane %v243, 1
    %vm265 = vcmask 1040384
    %v266 = vsel %vm265, %v194, %v245
    %vm267 = vcmask 1041408
    %v268 = vsel %vm267, %v266, %v248
    %vm269 = vcmask 1042432
    %v270 = vsel %vm269, %v268, %v251
    %vm271 = vcmask 1043456
    %v272 = vsel %vm271, %v270, %v254
    %vm273 = vcmask 1044480
    %v274 = vsel %vm273, %v272, %v257
    %vm275 = vcmask 1045504
    %v276 = vsel %vm275, %v274, %v260
    %vm277 = vcmask 1046528
    %v278 = vsel %vm277, %v276, %v263
    %v279 = vpack.c.bf16 %v278, %v278
    %v280 = vld [vmem:[%s5] sm:$0xff]
    %v281 = vld [vmem:[%s5 + $0x8] sm:$0xff]
    %v282 = vld [vmem:[%s5 + $0x10] sm:$0xff]
    %v283 = vld [vmem:[%s5 + $0x18] sm:$0xff]
    %v288 = vunpack.c.l.b16 %v280
    %v289 = vunpack.c.h.b16 %v280
    %v290 = vunpack.c.l.b16 %v281
    %v291 = vunpack.c.h.b16 %v281
    %v292 = vunpack.c.l.b16 %v282
    %v293 = vunpack.c.h.b16 %v282
    %v294 = vunpack.c.l.b16 %v283
    %v295 = vunpack.c.h.b16 %v283
    %v296 = vpack.c.b16 %v290, %v288
    %v297 = vpack.c.b16 %v291, %v289
    %v298 = vpack.c.b16 %v294, %v292
    %v299 = vpack.c.b16 %v295, %v293
    %v305 = vsel %vm126, %v279, 0
    %307 = vmatpush.bf16.msra.mxu0 0
    %308 = vmatpush.bf16.msra.mxu0 0
    %309 = vmatpush.bf16.msra.mxu0 0
    %310 = vmatpush.bf16.msra.mxu0 0
    %311 = vmatpush.bf16.msra.mxu0 0
    %312 = vmatpush.bf16.msra.mxu0 0
    %313 = vmatpush.bf16.msra.mxu0 %v298
    %314 = vmatpush.bf16.msra.mxu0 %v296
    %315 = vmatmul.bf16.gmra.mxu0 %v305
    %v316 = vpop.f32.mrf.mxu0
    %v317 = vadd.f32 0.0, %v316
    %v318 = vpop.f32.mrf.mxu0
    %319 = vdwg.mxu0
    %320 = vmatpush.bf16.msra.mxu0 0
    %321 = vmatpush.bf16.msra.mxu0 0
    %322 = vmatpush.bf16.msra.mxu0 0
    %323 = vmatpush.bf16.msra.mxu0 0
    %324 = vmatpush.bf16.msra.mxu0 0
    %325 = vmatpush.bf16.msra.mxu0 0
    %326 = vmatpush.bf16.msra.mxu0 %v299
    %327 = vmatpush.bf16.msra.mxu0 %v297
    %328 = vmatmul.bf16.gmra.mxu0 %v305
    %v329 = vpop.f32.mrf.mxu0
    %v330 = vadd.f32 0.0, %v329
    %v331 = vpop.f32.mrf.mxu0
    %332 = vdwg.mxu0
    %v333 = vadd.f32 %v317, %v140
    %v334 = vld [vmem:[%s12] sm:$0x1]
    %v335 = vperm.slane %v334, 0
    %v336 = vadd.f32 %v333, %v335
    %337 = vmax.xlane.f32.xlu0 %v336
    %v338 = vpop.xlane.xlu0 %337
    %v339 = vsub.f32 %v336, %v338
    %v340 = vmul.f32 %v339, 1.442695
    %v341 = vpow.pop %v340
    %342 = vadd.xlane.f32.xlu0 %v341
    %v343 = vpop.xlane.xlu0 %342
    %v344 = vrcp.pop %v343
    %v345 = vmul.f32 %v341, %v344
    %346 = vst [vmem:[#allocation13] sm:$0xff] %v345
    %v347 = vpack.c.bf16 %v345, %v345
    %v349 = vrot.slane %v347, 3
    %v352 = vsel %vm265, %v347, %v349
    %vm354 = vcmask 1041409
    %v355 = vsel %vm354, %v347, %v349
    %v357 = vrot.slane %v355, 1
    %vm358 = vcmask 1042434
    %v359 = vsel %vm358, %v347, %v349
    %v361 = vrot.slane %v359, 2
    %vm362 = vcmask 1043459
    %v363 = vsel %vm362, %v347, %v349
    %v365 = vrot.slane %v363, 3
    %v366 = vunpack.i.l.s16 %v352
    %v367 = vunpack.i.h.s16 %v352
    %v368 = vunpack.i.l.s16 %v357
    %v369 = vunpack.i.h.s16 %v357
    %v370 = vunpack.i.l.s16 %v361
    %v371 = vunpack.i.h.s16 %v361
    %v372 = vunpack.i.l.s16 %v365
    %v373 = vunpack.i.h.s16 %v365
    %v374 = vld [vmem:[%s2] sm:$0xf]
    %v375 = vld [vmem:[%s2 + $0x4] sm:$0xf]
    %v376 = vld [vmem:[%s2 + $0x8] sm:$0xf]
    %v377 = vld [vmem:[%s2 + $0xc] sm:$0xf]
    %v378 = vld [vmem:[%s2 + $0x10] sm:$0xf]
    %v379 = vld [vmem:[%s2 + $0x14] sm:$0xf]
    %v380 = vld [vmem:[%s2 + $0x18] sm:$0xf]
    %v381 = vld [vmem:[%s2 + $0x1c] sm:$0xf]
    %v382 = vld [vmem:[%s2 + $0x20] sm:$0xf]
    %v383 = vld [vmem:[%s2 + $0x24] sm:$0xf]
    %v384 = vld [vmem:[%s2 + $0x28] sm:$0xf]
    %v385 = vld [vmem:[%s2 + $0x2c] sm:$0xf]
    %v386 = vld [vmem:[%s2 + $0x30] sm:$0xf]
    %v387 = vld [vmem:[%s2 + $0x34] sm:$0xf]
    %v388 = vld [vmem:[%s2 + $0x38] sm:$0xf]
    %v389 = vld [vmem:[%s2 + $0x3c] sm:$0xf]
    %v390 = vld [vmem:[%s2 + $0x40] sm:$0xf]
    %v391 = vld [vmem:[%s2 + $0x44] sm:$0xf]
    %v392 = vld [vmem:[%s2 + $0x48] sm:$0xf]
    %v393 = vld [vmem:[%s2 + $0x4c] sm:$0xf]
    %v394 = vld [vmem:[%s2 + $0x50] sm:$0xf]
    %v395 = vld [vmem:[%s2 + $0x54] sm:$0xf]
    %v396 = vld [vmem:[%s2 + $0x58] sm:$0xf]
    %v397 = vld [vmem:[%s2 + $0x5c] sm:$0xf]
    %v398 = vld [vmem:[%s2 + $0x60] sm:$0xf]
    %v399 = vld [vmem:[%s2 + $0x64] sm:$0xf]
    %v400 = vld [vmem:[%s2 + $0x68] sm:$0xf]
    %v401 = vld [vmem:[%s2 + $0x6c] sm:$0xf]
    %v402 = vld [vmem:[%s2 + $0x70] sm:$0xf]
    %v403 = vld [vmem:[%s2 + $0x74] sm:$0xf]
    %v404 = vld [vmem:[%s2 + $0x78] sm:$0xf]
    %v405 = vld [vmem:[%s2 + $0x7c] sm:$0xf]
    %v406 = vld [vmem:[%s2 + $0x80] sm:$0xf]
    %v407 = vld [vmem:[%s2 + $0x84] sm:$0xf]
    %v408 = vld [vmem:[%s2 + $0x88] sm:$0xf]
    %v409 = vld [vmem:[%s2 + $0x8c] sm:$0xf]
    %v410 = vld [vmem:[%s2 + $0x90] sm:$0xf]
    %v411 = vld [vmem:[%s2 + $0x94] sm:$0xf]
    %v412 = vld [vmem:[%s2 + $0x98] sm:$0xf]
    %v413 = vld [vmem:[%s2 + $0x9c] sm:$0xf]
    %v414 = vld [vmem:[%s2 + $0xa0] sm:$0xf]
    %v415 = vld [vmem:[%s2 + $0xa4] sm:$0xf]
    %v416 = vld [vmem:[%s2 + $0xa8] sm:$0xf]
    %v417 = vld [vmem:[%s2 + $0xac] sm:$0xf]
    %v418 = vld [vmem:[%s2 + $0xb0] sm:$0xf]
    %v419 = vld [vmem:[%s2 + $0xb4] sm:$0xf]
    %v420 = vld [vmem:[%s2 + $0xb8] sm:$0xf]
    %v421 = vld [vmem:[%s2 + $0xbc] sm:$0xf]
    %v422 = vld [vmem:[%s2 + $0xc0] sm:$0xf]
    %v423 = vld [vmem:[%s2 + $0xc4] sm:$0xf]
    %v424 = vld [vmem:[%s2 + $0xc8] sm:$0xf]
    %v425 = vld [vmem:[%s2 + $0xcc] sm:$0xf]
    %v426 = vld [vmem:[%s2 + $0xd0] sm:$0xf]
    %v427 = vld [vmem:[%s2 + $0xd4] sm:$0xf]
    %v428 = vld [vmem:[%s2 + $0xd8] sm:$0xf]
    %v429 = vld [vmem:[%s2 + $0xdc] sm:$0xf]
    %v430 = vld [vmem:[%s2 + $0xe0] sm:$0xf]
    %v431 = vld [vmem:[%s2 + $0xe4] sm:$0xf]
    %v432 = vld [vmem:[%s2 + $0xe8] sm:$0xf]
    %v433 = vld [vmem:[%s2 + $0xec] sm:$0xf]
    %v434 = vld [vmem:[%s2 + $0xf0] sm:$0xf]
    %v435 = vld [vmem:[%s2 + $0xf4] sm:$0xf]
    %v436 = vld [vmem:[%s2 + $0xf8] sm:$0xf]
    %v437 = vld [vmem:[%s2 + $0xfc] sm:$0xf]
    %v438 = vld [vmem:[%s2 + $0x100] sm:$0xf]
    %v439 = vld [vmem:[%s2 + $0x104] sm:$0xf]
    %v440 = vld [vmem:[%s2 + $0x108] sm:$0xf]
    %v441 = vld [vmem:[%s2 + $0x10c] sm:$0xf]
    %v442 = vld [vmem:[%s2 + $0x110] sm:$0xf]
    %v443 = vld [vmem:[%s2 + $0x114] sm:$0xf]
    %v444 = vld [vmem:[%s2 + $0x118] sm:$0xf]
    %v445 = vld [vmem:[%s2 + $0x11c] sm:$0xf]
    %v446 = vld [vmem:[%s2 + $0x120] sm:$0xf]
    %v447 = vld [vmem:[%s2 + $0x124] sm:$0xf]
    %v448 = vld [vmem:[%s2 + $0x128] sm:$0xf]
    %v449 = vld [vmem:[%s2 + $0x12c] sm:$0xf]
    %v450 = vld [vmem:[%s2 + $0x130] sm:$0xf]
    %v451 = vld [vmem:[%s2 + $0x134] sm:$0xf]
    %v452 = vld [vmem:[%s2 + $0x138] sm:$0xf]
    %v453 = vld [vmem:[%s2 + $0x13c] sm:$0xf]
    %v454 = vld [vmem:[%s2 + $0x140] sm:$0xf]
    %v455 = vld [vmem:[%s2 + $0x144] sm:$0xf]
    %v456 = vld [vmem:[%s2 + $0x148] sm:$0xf]
    %v457 = vld [vmem:[%s2 + $0x14c] sm:$0xf]
    %v458 = vld [vmem:[%s2 + $0x150] sm:$0xf]
    %v459 = vld [vmem:[%s2 + $0x154] sm:$0xf]
    %v460 = vld [vmem:[%s2 + $0x158] sm:$0xf]
    %v461 = vld [vmem:[%s2 + $0x15c] sm:$0xf]
    %v462 = vld [vmem:[%s2 + $0x160] sm:$0xf]
    %v463 = vld [vmem:[%s2 + $0x164] sm:$0xf]
    %v464 = vld [vmem:[%s2 + $0x168] sm:$0xf]
    %v465 = vld [vmem:[%s2 + $0x16c] sm:$0xf]
    %v466 = vld [vmem:[%s2 + $0x170] sm:$0xf]
    %v467 = vld [vmem:[%s2 + $0x174] sm:$0xf]
    %v468 = vld [vmem:[%s2 + $0x178] sm:$0xf]
    %v469 = vld [vmem:[%s2 + $0x17c] sm:$0xf]
    %v470 = vld [vmem:[%s2 + $0x180] sm:$0xf]
    %v471 = vld [vmem:[%s2 + $0x184] sm:$0xf]
    %v472 = vld [vmem:[%s2 + $0x188] sm:$0xf]
    %v473 = vld [vmem:[%s2 + $0x18c] sm:$0xf]
    %v474 = vld [vmem:[%s2 + $0x190] sm:$0xf]
    %v475 = vld [vmem:[%s2 + $0x194] sm:$0xf]
    %v476 = vld [vmem:[%s2 + $0x198] sm:$0xf]
    %v477 = vld [vmem:[%s2 + $0x19c] sm:$0xf]
    %v478 = vld [vmem:[%s2 + $0x1a0] sm:$0xf]
    %v479 = vld [vmem:[%s2 + $0x1a4] sm:$0xf]
    %v480 = vld [vmem:[%s2 + $0x1a8] sm:$0xf]
    %v481 = vld [vmem:[%s2 + $0x1ac] sm:$0xf]
    %v482 = vld [vmem:[%s2 + $0x1b0] sm:$0xf]
    %v483 = vld [vmem:[%s2 + $0x1b4] sm:$0xf]
    %v484 = vld [vmem:[%s2 + $0x1b8] sm:$0xf]
    %v485 = vld [vmem:[%s2 + $0x1bc] sm:$0xf]
    %v486 = vld [vmem:[%s2 + $0x1c0] sm:$0xf]
    %v487 = vld [vmem:[%s2 + $0x1c4] sm:$0xf]
    %v488 = vld [vmem:[%s2 + $0x1c8] sm:$0xf]
    %v489 = vld [vmem:[%s2 + $0x1cc] sm:$0xf]
    %v490 = vld [vmem:[%s2 + $0x1d0] sm:$0xf]
    %v491 = vld [vmem:[%s2 + $0x1d4] sm:$0xf]
    %v492 = vld [vmem:[%s2 + $0x1d8] sm:$0xf]
    %v493 = vld [vmem:[%s2 + $0x1dc] sm:$0xf]
    %v494 = vld [vmem:[%s2 + $0x1e0] sm:$0xf]
    %v495 = vld [vmem:[%s2 + $0x1e4] sm:$0xf]
    %v496 = vld [vmem:[%s2 + $0x1e8] sm:$0xf]
    %v497 = vld [vmem:[%s2 + $0x1ec] sm:$0xf]
    %v498 = vld [vmem:[%s2 + $0x1f0] sm:$0xf]
    %v499 = vld [vmem:[%s2 + $0x1f4] sm:$0xf]
    %v500 = vld [vmem:[%s2 + $0x1f8] sm:$0xf]
    %v501 = vld [vmem:[%s2 + $0x1fc] sm:$0xf]
    %v502 = vpack.i.b16 %v366, %v366
    %v503 = vperm.slane %v502, 0
    %v521 = vunpack.c.l.b16 %v374
    %v522 = vunpack.c.l.b16 %v375
    %v523 = vunpack.c.l.b16 %v376
    %v524 = vunpack.c.l.b16 %v377
    %v525 = vunpack.c.l.b16 %v378
    %v526 = vunpack.c.l.b16 %v379
    %v527 = vunpack.c.l.b16 %v380
    %v528 = vunpack.c.l.b16 %v381
    %v529 = vunpack.c.l.b16 %v382
    %v530 = vunpack.c.l.b16 %v383
    %v531 = vunpack.c.l.b16 %v384
    %v532 = vunpack.c.l.b16 %v385
    %v533 = vunpack.c.l.b16 %v386
    %v534 = vunpack.c.l.b16 %v387
    %v535 = vunpack.c.l.b16 %v388
    %v536 = vunpack.c.l.b16 %v389
    %v537 = vpack.c.b16 %v522, %v521
    %v538 = vpack.c.b16 %v524, %v523
    %v539 = vpack.c.b16 %v526, %v525
    %v540 = vpack.c.b16 %v528, %v527
    %v541 = vpack.c.b16 %v530, %v529
    %v542 = vpack.c.b16 %v532, %v531
    %v543 = vpack.c.b16 %v534, %v533
    %v544 = vpack.c.b16 %v536, %v535
    %553 = vmatpush.bf16.msra.mxu0 %v544
    %554 = vmatpush.bf16.msra.mxu0 %v543
    %555 = vmatpush.bf16.msra.mxu0 %v542
    %556 = vmatpush.bf16.msra.mxu0 %v541
    %557 = vmatpush.bf16.msra.mxu0 %v540
    %558 = vmatpush.bf16.msra.mxu0 %v539
    %559 = vmatpush.bf16.msra.mxu0 %v538
    %560 = vmatpush.bf16.msra.mxu0 %v537
    %561 = vmatmul.bf16.gmra.mxu0 %v503
    %v562 = vpop.f32.mrf.mxu0
    %v563 = vadd.f32 0.0, %v562
    %v564 = vpop.f32.mrf.mxu0
    %565 = vdwg.mxu0
    %v566 = vpack.i.b16 %v367, %v367
    %v567 = vperm.slane %v566, 0
    %v585 = vunpack.c.l.b16 %v390
    %v586 = vunpack.c.l.b16 %v391
    %v587 = vunpack.c.l.b16 %v392
    %v588 = vunpack.c.l.b16 %v393
    %v589 = vunpack.c.l.b16 %v394
    %v590 = vunpack.c.l.b16 %v395
    %v591 = vunpack.c.l.b16 %v396
    %v592 = vunpack.c.l.b16 %v397
    %v593 = vunpack.c.l.b16 %v398
    %v594 = vunpack.c.l.b16 %v399
    %v595 = vunpack.c.l.b16 %v400
    %v596 = vunpack.c.l.b16 %v401
    %v597 = vunpack.c.l.b16 %v402
    %v598 = vunpack.c.l.b16 %v403
    %v599 = vunpack.c.l.b16 %v404
    %v600 = vunpack.c.l.b16 %v405
    %v601 = vpack.c.b16 %v586, %v585
    %v602 = vpack.c.b16 %v588, %v587
    %v603 = vpack.c.b16 %v590, %v589
    %v604 = vpack.c.b16 %v592, %v591
    %v605 = vpack.c.b16 %v594, %v593
    %v606 = vpack.c.b16 %v596, %v595
    %v607 = vpack.c.b16 %v598, %v597
    %v608 = vpack.c.b16 %v600, %v599
    %617 = vmatpush.bf16.msra.mxu0 %v608
    %618 = vmatpush.bf16.msra.mxu0 %v607
    %619 = vmatpush.bf16.msra.mxu0 %v606
    %620 = vmatpush.bf16.msra.mxu0 %v605
    %621 = vmatpush.bf16.msra.mxu0 %v604
    %622 = vmatpush.bf16.msra.mxu0 %v603
    %623 = vmatpush.bf16.msra.mxu0 %v602
    %624 = vmatpush.bf16.msra.mxu0 %v601
    %625 = vmatmul.bf16.gmra.mxu0 %v567
    %v626 = vpop.f32.mrf.mxu0
    %v627 = vadd.f32 0.0, %v626
    %v628 = vpop.f32.mrf.mxu0
    %629 = vdwg.mxu0
    %v630 = vpack.i.b16 %v368, %v368
    %v631 = vperm.slane %v630, 0
    %v649 = vunpack.c.l.b16 %v406
    %v650 = vunpack.c.l.b16 %v407
    %v651 = vunpack.c.l.b16 %v408
    %v652 = vunpack.c.l.b16 %v409
    %v653 = vunpack.c.l.b16 %v410
    %v654 = vunpack.c.l.b16 %v411
    %v655 = vunpack.c.l.b16 %v412
    %v656 = vunpack.c.l.b16 %v413
    %v657 = vunpack.c.l.b16 %v414
    %v658 = vunpack.c.l.b16 %v415
    %v659 = vunpack.c.l.b16 %v416
    %v660 = vunpack.c.l.b16 %v417
    %v661 = vunpack.c.l.b16 %v418
    %v662 = vunpack.c.l.b16 %v419
    %v663 = vunpack.c.l.b16 %v420
    %v664 = vunpack.c.l.b16 %v421
    %v665 = vpack.c.b16 %v650, %v649
    %v666 = vpack.c.b16 %v652, %v651
    %v667 = vpack.c.b16 %v654, %v653
    %v668 = vpack.c.b16 %v656, %v655
    %v669 = vpack.c.b16 %v658, %v657
    %v670 = vpack.c.b16 %v660, %v659
    %v671 = vpack.c.b16 %v662, %v661
    %v672 = vpack.c.b16 %v664, %v663
    %681 = vmatpush.bf16.msra.mxu0 %v672
    %682 = vmatpush.bf16.msra.mxu0 %v671
    %683 = vmatpush.bf16.msra.mxu0 %v670
    %684 = vmatpush.bf16.msra.mxu0 %v669
    %685 = vmatpush.bf16.msra.mxu0 %v668
    %686 = vmatpush.bf16.msra.mxu0 %v667
    %687 = vmatpush.bf16.msra.mxu0 %v666
    %688 = vmatpush.bf16.msra.mxu0 %v665
    %689 = vmatmul.bf16.gmra.mxu0 %v631
    %v690 = vpop.f32.mrf.mxu0
    %v691 = vadd.f32 0.0, %v690
    %v692 = vpop.f32.mrf.mxu0
    %693 = vdwg.mxu0
    %v694 = vpack.i.b16 %v369, %v369
    %v695 = vperm.slane %v694, 0
    %v713 = vunpack.c.l.b16 %v422
    %v714 = vunpack.c.l.b16 %v423
    %v715 = vunpack.c.l.b16 %v424
    %v716 = vunpack.c.l.b16 %v425
    %v717 = vunpack.c.l.b16 %v426
    %v718 = vunpack.c.l.b16 %v427
    %v719 = vunpack.c.l.b16 %v428
    %v720 = vunpack.c.l.b16 %v429
    %v721 = vunpack.c.l.b16 %v430
    %v722 = vunpack.c.l.b16 %v431
    %v723 = vunpack.c.l.b16 %v432
    %v724 = vunpack.c.l.b16 %v433
    %v725 = vunpack.c.l.b16 %v434
    %v726 = vunpack.c.l.b16 %v435
    %v727 = vunpack.c.l.b16 %v436
    %v728 = vunpack.c.l.b16 %v437
    %v729 = vpack.c.b16 %v714, %v713
    %v730 = vpack.c.b16 %v716, %v715
    %v731 = vpack.c.b16 %v718, %v717
    %v732 = vpack.c.b16 %v720, %v719
    %v733 = vpack.c.b16 %v722, %v721
    %v734 = vpack.c.b16 %v724, %v723
    %v735 = vpack.c.b16 %v726, %v725
    %v736 = vpack.c.b16 %v728, %v727
    %745 = vmatpush.bf16.msra.mxu0 %v736
    %746 = vmatpush.bf16.msra.mxu0 %v735
    %747 = vmatpush.bf16.msra.mxu0 %v734
    %748 = vmatpush.bf16.msra.mxu0 %v733
    %749 = vmatpush.bf16.msra.mxu0 %v732
    %750 = vmatpush.bf16.msra.mxu0 %v731
    %751 = vmatpush.bf16.msra.mxu0 %v730
    %752 = vmatpush.bf16.msra.mxu0 %v729
    %753 = vmatmul.bf16.gmra.mxu0 %v695
    %v754 = vpop.f32.mrf.mxu0
    %v755 = vadd.f32 0.0, %v754
    %v756 = vpop.f32.mrf.mxu0
    %757 = vdwg.mxu0
    %v758 = vpack.i.b16 %v370, %v370
    %v759 = vperm.slane %v758, 0
    %v777 = vunpack.c.l.b16 %v438
    %v778 = vunpack.c.l.b16 %v439
    %v779 = vunpack.c.l.b16 %v440
    %v780 = vunpack.c.l.b16 %v441
    %v781 = vunpack.c.l.b16 %v442
    %v782 = vunpack.c.l.b16 %v443
    %v783 = vunpack.c.l.b16 %v444
    %v784 = vunpack.c.l.b16 %v445
    %v785 = vunpack.c.l.b16 %v446
    %v786 = vunpack.c.l.b16 %v447
    %v787 = vunpack.c.l.b16 %v448
    %v788 = vunpack.c.l.b16 %v449
    %v789 = vunpack.c.l.b16 %v450
    %v790 = vunpack.c.l.b16 %v451
    %v791 = vunpack.c.l.b16 %v452
    %v792 = vunpack.c.l.b16 %v453
    %v793 = vpack.c.b16 %v778, %v777
    %v794 = vpack.c.b16 %v780, %v779
    %v795 = vpack.c.b16 %v782, %v781
    %v796 = vpack.c.b16 %v784, %v783
    %v797 = vpack.c.b16 %v786, %v785
    %v798 = vpack.c.b16 %v788, %v787
    %v799 = vpack.c.b16 %v790, %v789
    %v800 = vpack.c.b16 %v792, %v791
    %809 = vmatpush.bf16.msra.mxu0 %v800
    %810 = vmatpush.bf16.msra.mxu0 %v799
    %811 = vmatpush.bf16.msra.mxu0 %v798
    %812 = vmatpush.bf16.msra.mxu0 %v797
    %813 = vmatpush.bf16.msra.mxu0 %v796
    %814 = vmatpush.bf16.msra.mxu0 %v795
    %815 = vmatpush.bf16.msra.mxu0 %v794
    %816 = vmatpush.bf16.msra.mxu0 %v793
    %817 = vmatmul.bf16.gmra.mxu0 %v759
    %v818 = vpop.f32.mrf.mxu0
    %v819 = vadd.f32 0.0, %v818
    %v820 = vpop.f32.mrf.mxu0
    %821 = vdwg.mxu0
    %v822 = vpack.i.b16 %v371, %v371
    %v823 = vperm.slane %v822, 0
    %v841 = vunpack.c.l.b16 %v454
    %v842 = vunpack.c.l.b16 %v455
    %v843 = vunpack.c.l.b16 %v456
    %v844 = vunpack.c.l.b16 %v457
    %v845 = vunpack.c.l.b16 %v458
    %v846 = vunpack.c.l.b16 %v459
    %v847 = vunpack.c.l.b16 %v460
    %v848 = vunpack.c.l.b16 %v461
    %v849 = vunpack.c.l.b16 %v462
    %v850 = vunpack.c.l.b16 %v463
    %v851 = vunpack.c.l.b16 %v464
    %v852 = vunpack.c.l.b16 %v465
    %v853 = vunpack.c.l.b16 %v466
    %v854 = vunpack.c.l.b16 %v467
    %v855 = vunpack.c.l.b16 %v468
    %v856 = vunpack.c.l.b16 %v469
    %v857 = vpack.c.b16 %v842, %v841
    %v858 = vpack.c.b16 %v844, %v843
    %v859 = vpack.c.b16 %v846, %v845
    %v860 = vpack.c.b16 %v848, %v847
    %v861 = vpack.c.b16 %v850, %v849
    %v862 = vpack.c.b16 %v852, %v851
    %v863 = vpack.c.b16 %v854, %v853
    %v864 = vpack.c.b16 %v856, %v855
    %873 = vmatpush.bf16.msra.mxu0 %v864
    %874 = vmatpush.bf16.msra.mxu0 %v863
    %875 = vmatpush.bf16.msra.mxu0 %v862
    %876 = vmatpush.bf16.msra.mxu0 %v861
    %877 = vmatpush.bf16.msra.mxu0 %v860
    %878 = vmatpush.bf16.msra.mxu0 %v859
    %879 = vmatpush.bf16.msra.mxu0 %v858
    %880 = vmatpush.bf16.msra.mxu0 %v857
    %881 = vmatmul.bf16.gmra.mxu0 %v823
    %v882 = vpop.f32.mrf.mxu0
    %v883 = vadd.f32 0.0, %v882
    %v884 = vpop.f32.mrf.mxu0
    %885 = vdwg.mxu0
    %v886 = vpack.i.b16 %v372, %v372
    %v887 = vperm.slane %v886, 0
    %v905 = vunpack.c.l.b16 %v470
    %v906 = vunpack.c.l.b16 %v471
    %v907 = vunpack.c.l.b16 %v472
    %v908 = vunpack.c.l.b16 %v473
    %v909 = vunpack.c.l.b16 %v474
    %v910 = vunpack.c.l.b16 %v475
    %v911 = vunpack.c.l.b16 %v476
    %v912 = vunpack.c.l.b16 %v477
    %v913 = vunpack.c.l.b16 %v478
    %v914 = vunpack.c.l.b16 %v479
    %v915 = vunpack.c.l.b16 %v480
    %v916 = vunpack.c.l.b16 %v481
    %v917 = vunpack.c.l.b16 %v482
    %v918 = vunpack.c.l.b16 %v483
    %v919 = vunpack.c.l.b16 %v484
    %v920 = vunpack.c.l.b16 %v485
    %v921 = vpack.c.b16 %v906, %v905
    %v922 = vpack.c.b16 %v908, %v907
    %v923 = vpack.c.b16 %v910, %v909
    %v924 = vpack.c.b16 %v912, %v911
    %v925 = vpack.c.b16 %v914, %v913
    %v926 = vpack.c.b16 %v916, %v915
    %v927 = vpack.c.b16 %v918, %v917
    %v928 = vpack.c.b16 %v920, %v919
    %937 = vmatpush.bf16.msra.mxu0 %v928
    %938 = vmatpush.bf16.msra.mxu0 %v927
    %939 = vmatpush.bf16.msra.mxu0 %v926
    %940 = vmatpush.bf16.msra.mxu0 %v925
    %941 = vmatpush.bf16.msra.mxu0 %v924
    %942 = vmatpush.bf16.msra.mxu0 %v923
    %943 = vmatpush.bf16.msra.mxu0 %v922
    %944 = vmatpush.bf16.msra.mxu0 %v921
    %945 = vmatmul.bf16.gmra.mxu0 %v887
    %v946 = vpop.f32.mrf.mxu0
    %v947 = vadd.f32 0.0, %v946
    %v948 = vpop.f32.mrf.mxu0
    %949 = vdwg.mxu0
    %v950 = vpack.i.b16 %v373, %v373
    %v951 = vperm.slane %v950, 0
    %v969 = vunpack.c.l.b16 %v486
    %v970 = vunpack.c.l.b16 %v487
    %v971 = vunpack.c.l.b16 %v488
    %v972 = vunpack.c.l.b16 %v489
    %v973 = vunpack.c.l.b16 %v490
    %v974 = vunpack.c.l.b16 %v491
    %v975 = vunpack.c.l.b16 %v492
    %v976 = vunpack.c.l.b16 %v493
    %v977 = vunpack.c.l.b16 %v494
    %v978 = vunpack.c.l.b16 %v495
    %v979 = vunpack.c.l.b16 %v496
    %v980 = vunpack.c.l.b16 %v497
    %v981 = vunpack.c.l.b16 %v498
    %v982 = vunpack.c.l.b16 %v499
    %v983 = vunpack.c.l.b16 %v500
    %v984 = vunpack.c.l.b16 %v501
    %v985 = vpack.c.b16 %v970, %v969
    %v986 = vpack.c.b16 %v972, %v971
    %v987 = vpack.c.b16 %v974, %v973
    %v988 = vpack.c.b16 %v976, %v975
    %v989 = vpack.c.b16 %v978, %v977
    %v990 = vpack.c.b16 %v980, %v979
    %v991 = vpack.c.b16 %v982, %v981
    %v992 = vpack.c.b16 %v984, %v983
    %1001 = vmatpush.bf16.msra.mxu0 %v992
    %1002 = vmatpush.bf16.msra.mxu0 %v991
    %1003 = vmatpush.bf16.msra.mxu0 %v990
    %1004 = vmatpush.bf16.msra.mxu0 %v989
    %1005 = vmatpush.bf16.msra.mxu0 %v988
    %1006 = vmatpush.bf16.msra.mxu0 %v987
    %1007 = vmatpush.bf16.msra.mxu0 %v986
    %1008 = vmatpush.bf16.msra.mxu0 %v985
    %1009 = vmatmul.bf16.gmra.mxu0 %v951
    %v1010 = vpop.f32.mrf.mxu0
    %v1011 = vadd.f32 0.0, %v1010
    %v1012 = vpop.f32.mrf.mxu0
    %1013 = vdwg.mxu0
    %v1014 = vpack.c.bf16 %v563, %v563
    %v1015 = vpack.c.bf16 %v627, %v627
    %v1016 = vpack.c.bf16 %v691, %v691
    %v1017 = vpack.c.bf16 %v755, %v755
    %v1018 = vpack.c.bf16 %v819, %v819
    %v1019 = vpack.c.bf16 %v883, %v883
    %v1020 = vpack.c.bf16 %v947, %v947
    %v1021 = vpack.c.bf16 %v1011, %v1011
    %v1022 = vld [vmem:[%s7] sm:$0xf]
    %v1023 = vld [vmem:[%s7 + $0x4] sm:$0xf]
    %v1024 = vld [vmem:[%s7 + $0x8] sm:$0xf]
    %v1025 = vld [vmem:[%s7 + $0xc] sm:$0xf]
    %v1034 = vunpack.c.l.b16 %v1014
    %v1035 = vunpack.c.l.b16 %v1015
    %v1036 = vunpack.c.l.b16 %v1016
    %v1037 = vunpack.c.l.b16 %v1017
    %v1038 = vunpack.c.l.b16 %v1018
    %v1039 = vunpack.c.l.b16 %v1019
    %v1040 = vunpack.c.l.b16 %v1020
    %v1041 = vunpack.c.l.b16 %v1021
    %v1042 = vrot.slane %v1035, 7
    %v1043 = vsel %vm354, %v1042, %v1034
    %v1044 = vrot.slane %v1036, 6
    %v1045 = vsel %vm358, %v1044, %v1043
    %v1046 = vrot.slane %v1037, 5
    %v1047 = vsel %vm362, %v1046, %v1045
    %v1048 = vrot.slane %v1038, 4
    %vm1049 = vcmask 1044484
    %v1050 = vsel %vm1049, %v1048, %v1047
    %v1051 = vrot.slane %v1039, 3
    %vm1052 = vcmask 1045509
    %v1053 = vsel %vm1052, %v1051, %v1050
    %v1054 = vrot.slane %v1040, 2
    %vm1055 = vcmask 1046534
    %v1056 = vsel %vm1055, %v1054, %v1053
    %v1057 = vrot.slane %v1041, 1
    %vm1058 = vcmask 1047559
    %v1059 = vsel %vm1058, %v1057, %v1056
    %v1060 = vpack.c.b16 %v1059, %v1059
    %v1065 = vunpack.c.l.b16 %v1022
    %v1066 = vunpack.c.l.b16 %v1023
    %v1067 = vunpack.c.l.b16 %v1024
    %v1068 = vunpack.c.l.b16 %v1025
    %v1069 = vpack.c.b16 %v1066, %v1065
    %v1070 = vpack.c.b16 %v1068, %v1067
    %v1074 = vsel %vm126, %v1060, 0
    %1076 = vmatpush.bf16.msra.mxu0 0
    %1077 = vmatpush.bf16.msra.mxu0 0
    %1078 = vmatpush.bf16.msra.mxu0 0
    %1079 = vmatpush.bf16.msra.mxu0 0
    %1080 = vmatpush.bf16.msra.mxu0 0
    %1081 = vmatpush.bf16.msra.mxu0 0
    %1082 = vmatpush.bf16.msra.mxu0 %v1070
    %1083 = vmatpush.bf16.msra.mxu0 %v1069
    %1084 = vmatmul.bf16.gmra.mxu0 %v1074
    %v1085 = vpop.f32.mrf.mxu0
    %v1086 = vadd.f32 0.0, %v1085
    %v1087 = vpop.f32.mrf.mxu0
    %1088 = vdwg.mxu0
    %v1089 = vadd.f32 %v330, %v1086
    %v1090 = vld [vmem:[%s12 + $0x1] sm:$0x1]
    %v1091 = vperm.slane %v1090, 0
    %v1092 = vadd.f32 %v1089, %v1091
    %v1093 = vpack.c.bf16 %v1092, %v1092
    %v1094 = vld [vmem:[%s8] sm:$0xf]
    %v1095 = vld [vmem:[%s8 + $0x4] sm:$0xf]
    %v1096 = vld [vmem:[%s8 + $0x8] sm:$0xf]
    %v1097 = vld [vmem:[%s8 + $0xc] sm:$0xf]
    %v1098 = vld [vmem:[%s8 + $0x10] sm:$0xf]
    %v1099 = vld [vmem:[%s8 + $0x14] sm:$0xf]
    %v1100 = vld [vmem:[%s8 + $0x18] sm:$0xf]
    %v1101 = vld [vmem:[%s8 + $0x1c] sm:$0xf]
    %v1102 = vld [vmem:[%s8 + $0x20] sm:$0xf]
    %v1103 = vld [vmem:[%s8 + $0x24] sm:$0xf]
    %v1104 = vld [vmem:[%s8 + $0x28] sm:$0xf]
    %v1105 = vld [vmem:[%s8 + $0x2c] sm:$0xf]
    %v1106 = vld [vmem:[%s8 + $0x30] sm:$0xf]
    %v1107 = vld [vmem:[%s8 + $0x34] sm:$0xf]
    %v1108 = vld [vmem:[%s8 + $0x38] sm:$0xf]
    %v1109 = vld [vmem:[%s8 + $0x3c] sm:$0xf]
    %v1126 = vunpack.c.l.b16 %v1094
    %v1127 = vunpack.c.l.b16 %v1095
    %v1128 = vunpack.c.l.b16 %v1096
    %v1129 = vunpack.c.l.b16 %v1097
    %v1130 = vunpack.c.l.b16 %v1098
    %v1131 = vunpack.c.l.b16 %v1099
    %v1132 = vunpack.c.l.b16 %v1100
    %v1133 = vunpack.c.l.b16 %v1101
    %v1134 = vunpack.c.l.b16 %v1102
    %v1135 = vunpack.c.l.b16 %v1103
    %v1136 = vunpack.c.l.b16 %v1104
    %v1137 = vunpack.c.l.b16 %v1105
    %v1138 = vunpack.c.l.b16 %v1106
    %v1139 = vunpack.c.l.b16 %v1107
    %v1140 = vunpack.c.l.b16 %v1108
    %v1141 = vunpack.c.l.b16 %v1109
    %v1142 = vpack.c.b16 %v1127, %v1126
    %v1143 = vpack.c.b16 %v1129, %v1128
    %v1144 = vpack.c.b16 %v1131, %v1130
    %v1145 = vpack.c.b16 %v1133, %v1132
    %v1146 = vpack.c.b16 %v1135, %v1134
    %v1147 = vpack.c.b16 %v1137, %v1136
    %v1148 = vpack.c.b16 %v1139, %v1138
    %v1149 = vpack.c.b16 %v1141, %v1140
    %1158 = vmatpush.bf16.msra.mxu0 %v1149
    %1159 = vmatpush.bf16.msra.mxu0 %v1148
    %1160 = vmatpush.bf16.msra.mxu0 %v1147
    %1161 = vmatpush.bf16.msra.mxu0 %v1146
    %1162 = vmatpush.bf16.msra.mxu0 %v1145
    %1163 = vmatpush.bf16.msra.mxu0 %v1144
    %1164 = vmatpush.bf16.msra.mxu0 %v1143
    %1165 = vmatpush.bf16.msra.mxu0 %v1142
    %1166 = vmatmul.bf16.gmra.mxu0 %v1093
    %v1167 = vpop.f32.mrf.mxu0
    %v1168 = vadd.f32 %v185, %v1167
    %v1169 = vpop.f32.mrf.mxu0
    %1170 = vdwg.mxu0
    %v1171 = vld [vmem:[%s12 + $0x2] sm:$0x1]
    %v1172 = vperm.slane %v1171, 0
    %v1173 = vadd.f32 %v1168, %v1172
    %v1174 = vld [vmem:[#allocation7] sm:$0xff]
    %v1175 = vxor.u32 %v1173, 2147483648
    %v1176 = vmul.f32 %v1175, 1.442695
    %v1177 = vpow.pop %v1176
    %v1178 = vadd.f32 %v1177, 1.0
    %v1179 = vrcp.pop %v1178
    %v1180 = vmul.f32 %v1178, %v1179
    %v1181 = vsub.f32 1.0, %v1180
    %v1182 = vmul.f32 %v1179, %v1181
    %v1183 = vadd.f32 %v1179, %v1182
    %vm1184 = vweird.f32 %v1178
    %vm1185 = vweird.f32 %v1179
    %vm1186 = vmor %vm1184, %vm1185
    %v1187 = vsel %vm1186, %v1179, %v1183
    %v1188 = vand.u32 2147483647, %v1178
    %vm1189 = vcmp.eq.f32.partialorder %v1188, 8.507059e+37
    %v1190 = vand.u32 %v1178, 2147483648
    %v1191 = vor.u32 1.1754944e-38, %v1190
    %v1192 = vsel %vm1189, %v1191, %v1187
    %v1193 = vmul.f32 1.0, %v1192
    %v1194 = vtanh.pop %v1173
    %1196 = vrot.lane.b32.xlu0 %v1174, 32
    %v1197 = vpop.permute.xlu0 %1196
    %v1199 = vmul.f32 %v1193, %v1197
    %1201 = vrot.lane.b32.xlu0 %v1194, 64
    %v1202 = vpop.permute.xlu0 %1201
    %v1204 = vmul.f32 %v1193, %v1202
    %1206 = vrot.lane.b32.xlu0 %v1204, 32
    %v1207 = vpop.permute.xlu0 %1206
    %v1209 = vadd.f32 %v1199, %v1207
    %v1210 = vtanh.pop %v1209
    %1212 = vrot.lane.b32.xlu0 %v1210, 64
    %v1213 = vpop.permute.xlu0 %1212
    %v1215 = vmul.f32 %v1193, %v1213
    %v1216 = vpack.c.bf16 %v1215, %v1215
    %v1217 = vld [vmem:[%s10] sm:$0xf]
    %v1218 = vld [vmem:[%s10 + $0x4] sm:$0xf]
    %v1219 = vld [vmem:[%s10 + $0x8] sm:$0xf]
    %v1220 = vld [vmem:[%s10 + $0xc] sm:$0xf]
    %1222 = vrot.lane.b32.xlu0 %v1216, 32
    %v1223 = vpop.permute.xlu0 %1222
    %v1228 = vunpack.c.l.b16 %v1217
    %v1229 = vunpack.c.l.b16 %v1218
    %v1230 = vunpack.c.l.b16 %v1219
    %v1231 = vunpack.c.l.b16 %v1220
    %v1232 = vpack.c.b16 %v1229, %v1228
    %v1233 = vpack.c.b16 %v1231, %v1230
    %v1237 = vsel %vm126, %v1223, 0
    %1239 = vmatpush.bf16.msra.mxu0 0
    %1240 = vmatpush.bf16.msra.mxu0 0
    %1241 = vmatpush.bf16.msra.mxu0 0
    %1242 = vmatpush.bf16.msra.mxu0 0
    %1243 = vmatpush.bf16.msra.mxu0 0
    %1244 = vmatpush.bf16.msra.mxu0 0
    %1245 = vmatpush.bf16.msra.mxu0 %v1233
    %1246 = vmatpush.bf16.msra.mxu0 %v1232
    %1247 = vmatmul.bf16.gmra.mxu0 %v1237
    %v1248 = vpop.f32.mrf.mxu0
    %v1249 = vadd.f32 %v153, %v1248
    %v1250 = vpop.f32.mrf.mxu0
    %1251 = vdwg.mxu0
    %v1252 = vld [vmem:[%s12 + $0x3] sm:$0x1]
    %v1253 = vperm.slane %v1252, 0
    %v1254 = vadd.f32 %v1249, %v1253
    %s1255 = scalar_lea.vmem [#allocation7], 8
    %v1256 = vld [vmem:[%s1255] sm:$0xff]
    %v1257 = vxor.u32 %v1254, 2147483648
    %v1258 = vmul.f32 %v1257, 1.442695
    %v1259 = vpow.pop %v1258
    %v1260 = vadd.f32 %v1259, 1.0
    %v1261 = vrcp.pop %v1260
    %v1262 = vmul.f32 %v1260, %v1261
    %v1263 = vsub.f32 1.0, %v1262
    %v1264 = vmul.f32 %v1261, %v1263
    %v1265 = vadd.f32 %v1261, %v1264
    %vm1266 = vweird.f32 %v1260
    %vm1267 = vweird.f32 %v1261
    %vm1268 = vmor %vm1266, %vm1267
    %v1269 = vsel %vm1268, %v1261, %v1265
    %v1270 = vand.u32 2147483647, %v1260
    %vm1271 = vcmp.eq.f32.partialorder %v1270, 8.507059e+37
    %v1272 = vand.u32 %v1260, 2147483648
    %v1273 = vor.u32 1.1754944e-38, %v1272
    %v1274 = vsel %vm1271, %v1273, %v1269
    %v1275 = vmul.f32 1.0, %v1274
    %v1276 = vtanh.pop %v1254
    %1278 = vrot.lane.b32.xlu0 %v1256, 32
    %v1279 = vpop.permute.xlu0 %1278
    %v1281 = vmul.f32 %v1275, %v1279
    %1283 = vrot.lane.b32.xlu0 %v1276, 64
    %v1284 = vpop.permute.xlu0 %1283
    %v1286 = vmul.f32 %v1275, %v1284
    %1288 = vrot.lane.b32.xlu0 %v1286, 32
    %v1289 = vpop.permute.xlu0 %1288
    %v1291 = vadd.f32 %v1281, %v1289
    %v1292 = vtanh.pop %v1291
    %1294 = vrot.lane.b32.xlu0 %v1292, 64
    %v1295 = vpop.permute.xlu0 %1294
    %v1297 = vmul.f32 %v1275, %v1295
    %v1298 = vpack.c.bf16 %v1297, %v1297
    %v1299 = vld [vmem:[%s11] sm:$0xf]
    %v1300 = vld [vmem:[%s11 + $0x4] sm:$0xf]
    %v1301 = vld [vmem:[%s11 + $0x8] sm:$0xf]
    %v1302 = vld [vmem:[%s11 + $0xc] sm:$0xf]
    %v1303 = vld [vmem:[%s12 + $0x4] sm:$0x1]
    %v1304 = vperm.slane %v1303, 0
    %1306 = vrot.lane.b32.xlu0 %v1298, 32
    %v1307 = vpop.permute.xlu0 %1306
    %v1312 = vunpack.c.l.b16 %v1299
    %v1313 = vunpack.c.l.b16 %v1300
    %v1314 = vunpack.c.l.b16 %v1301
    %v1315 = vunpack.c.l.b16 %v1302
    %v1316 = vpack.c.b16 %v1313, %v1312
    %v1317 = vpack.c.b16 %v1315, %v1314
    %v1321 = vsel %vm126, %v1307, 0
    %1323 = vmatpush.bf16.msra.mxu0 0
    %1324 = vmatpush.bf16.msra.mxu0 0
    %1325 = vmatpush.bf16.msra.mxu0 0
    %1326 = vmatpush.bf16.msra.mxu0 0
    %1327 = vmatpush.bf16.msra.mxu0 0
    %1328 = vmatpush.bf16.msra.mxu0 0
    %1329 = vmatpush.bf16.msra.mxu0 %v1317
    %1330 = vmatpush.bf16.msra.mxu0 %v1316
    %1331 = vmatmul.bf16.gmra.mxu0 %v1321
    %v1332 = vpop.f32.mrf.mxu0
    %v1333 = vadd.f32 %v1304, %v1332
    %v1334 = vpop.f32.mrf.mxu0
    %1335 = vdwg.mxu0
    %1336 = vmax.xlane.f32.xlu0 %v1333
    %v1337 = vpop.xlane.xlu0 %1336
    %v1338 = vsub.f32 %v1333, %v1337
    %v1339 = vmul.f32 %v1338, 1.442695
    %v1340 = vpow.pop %v1339
    %1341 = vadd.xlane.f32.xlu0 %v1340
    %v1342 = vpop.xlane.xlu0 %1341
    %v1343 = vlog2.pop %v1342
    %v1344 = vmul.f32 %v1343, 0.6931472
    %v1345 = vadd.f32 %v1344, %v1337
    %v1346 = vsub.f32 %v1333, %v1345
    %1347 = vst [vmem:[#allocation9] sm:$0xff] %v1346
    %1349 = vrot.lane.b32.xlu0 %v1215, 32
    %v1350 = vpop.permute.xlu0 %1349
    %1352 = vst.msk [vmem:[#allocation10] sm:$0xff] %vm126, %v1350
    %1354 = vrot.lane.b32.xlu0 %v1297, 32
    %v1355 = vpop.permute.xlu0 %1354
    %s1357 = scalar_lea.vmem [#allocation10], 8
    %1358 = vst.msk [vmem:[%s1357] sm:$0xff] %vm126, %v1355
    %1360 = vrot.lane.b32.xlu0 %v1209, 96
    %v1361 = vpop.permute.xlu0 %1360
    %1363 = vst.msk [vmem:[#allocation12] sm:$0xff] %vm126, %v1361
    %1365 = vrot.lane.b32.xlu0 %v1291, 96
    %v1366 = vpop.permute.xlu0 %1365
    %s1368 = scalar_lea.vmem [#allocation12], 8
    %1369 = vst.msk [vmem:[%s1368] sm:$0xff] %vm126, %v1366
    // Predicated region
    $region66: #{tpu_custom_call.1} parent=1 // pred_check
      _
    $region67: #{tpu_custom_call.1} parent=1 // pred_check_branch
      %1371 = sbr.rel (0) target = $region69
    $region68: #{tpu_custom_call.1} parent=1 // pred_region
      %1373 = vsyncadd [#allocation4], 0
      %s1375 = sshll.u32 [#allocation9], 4
      %s1376 = int_to_ptr.vmem [resolvable:$true] %s1375
      %s1377 = sshll.u32 %s13, 4
      %s1378 = int_to_ptr.hbm [resolvable:$true] %s1377
      %1380 = dma.vmem_to_hbm [thread:$0]  %s1376, 128, %s1378, [#allocation4]
    $region69: #{tpu_custom_call.1} parent=1 // pred_fallthru
      _
    // Predicated region
    $region70: #{tpu_custom_call.1} parent=1 // pred_check
      _
    $region71: #{tpu_custom_call.1} parent=1 // pred_check_branch
      %1382 = sbr.rel (0) target = $region73
    $region72: #{tpu_custom_call.1} parent=1 // pred_region
      %1384 = vsyncadd [#allocation11], 0
      %s1385 = sshll.u32 [#allocation10], 4
      %s1386 = int_to_ptr.vmem [resolvable:$true] %s1385
      %s1387 = sshll.u32 %s14, 4
      %s1388 = int_to_ptr.hbm [resolvable:$true] %s1387
      %1393 = dma.vmem_to_hbm [thread:$0]  %s1386, 256, %s1388, [#allocation11], 128, 128, 8
    $region73: #{tpu_custom_call.1} parent=1 // pred_fallthru
      _
    // Predicated region
    $region74: #{tpu_custom_call.1} parent=1 // pred_check
      _
    $region75: #{tpu_custom_call.1} parent=1 // pred_check_branch
      %1395 = sbr.rel (0) target = $region77
    $region76: #{tpu_custom_call.1} parent=1 // pred_region
      %1397 = vsyncadd [#allocation11], 0
      %s1398 = sshll.u32 [#allocation12], 4
      %s1399 = int_to_ptr.vmem [resolvable:$true] %s1398
      %s1400 = sshll.u32 %s15, 4
      %s1401 = int_to_ptr.hbm [resolvable:$true] %s1400
      %1406 = dma.vmem_to_hbm [thread:$0]  %s1399, 256, %s1401, [#allocation11], 128, 128, 8
    $region77: #{tpu_custom_call.1} parent=1 // pred_fallthru
      _
    // Predicated region
    $region78: #{tpu_custom_call.1} parent=1 // pred_check
      _
    $region79: #{tpu_custom_call.1} parent=1 // pred_check_branch
      %1408 = sbr.rel (0) target = $region81
    $region80: #{tpu_custom_call.1} parent=1 // pred_region
      %1410 = vsyncadd [#allocation14], 0
      %s1412 = sshll.u32 [#allocation13], 4
      %s1413 = int_to_ptr.vmem [resolvable:$true] %s1412
      %s1414 = sshll.u32 %s16, 4
      %s1415 = int_to_ptr.hbm [resolvable:$true] %s1414
      %1417 = dma.vmem_to_hbm [thread:$0]  %s1413, 128, %s1415, [#allocation14]
    $region81: #{tpu_custom_call.1} parent=1 // pred_fallthru
      _
    // Predicated region
    $region82: #{tpu_custom_call.1} parent=1 // pred_check
      _
    $region83: #{tpu_custom_call.1} parent=1 // pred_check_branch
      %1419 = sbr.rel (0) target = $region85
    $region84: #{tpu_custom_call.1} parent=1 // pred_region
      %1421 = dma.done [#allocation4], 128
    $region85: #{tpu_custom_call.1} parent=1 // pred_fallthru
      _
    // Predicated region
    $region86: #{tpu_custom_call.1} parent=1 // pred_check
      _
    $region87: #{tpu_custom_call.1} parent=1 // pred_check_branch
      %1423 = sbr.rel (0) target = $region89
    $region88: #{tpu_custom_call.1} parent=1 // pred_region
      %1425 = dma.done [#allocation11], 256
    $region89: #{tpu_custom_call.1} parent=1 // pred_fallthru
      _
    // Predicated region
    $region90: #{tpu_custom_call.1} parent=1 // pred_check
      _
    $region91: #{tpu_custom_call.1} parent=1 // pred_check_branch
      %1427 = sbr.rel (0) target = $region93
    $region92: #{tpu_custom_call.1} parent=1 // pred_region
      %1429 = dma.done [#allocation11], 256
    $region93: #{tpu_custom_call.1} parent=1 // pred_fallthru
      _
    // Predicated region
    $region94: #{tpu_custom_call.1} parent=1 // pred_check
      _
    $region95: #{tpu_custom_call.1} parent=1 // pred_check_branch
      %1431 = sbr.rel (0) target = $region97
    $region96: #{tpu_custom_call.1} parent=1 // pred_region
      %1433 = dma.done [#allocation14], 128
    $region97: #{tpu_custom_call.1} parent=1 // pred_fallthru
      _
    %1434 = vsyncpa [#allocation3], 1
    %1435 = vsyncpa [#allocation8], 1
    %1436 = vsyncpa [#allocation4], 1
    %1437 = vsyncpa [#allocation11], 1
    %1438 = vsyncpa [#allocation14], 1
    %1439 = vsyncpa [#allocation5], 1

</llo_original>
